<compile_context>
chip_gen: v5e
topology: v5e:2x2
jax: 0.10.0
libtpu: 0.0.40
codegen_flags: <defaults>
</compile_context>

<pallas_src>
import functools

import jax
import jax.numpy as jnp
from jax import lax
from jax.experimental import pallas as pl
from jax.experimental.pallas import tpu as pltpu


# -----------------------------------------------------------------------------
# Vectorized Transformer-XL relative shift on (H, cur, T) score matrices.
# -----------------------------------------------------------------------------
def _rel_shift_heads(scores):
    """Equivalent (per head) to the reference
        cat([zeros(cur, 1), A], dim=1).view(T+1, cur)[1:].view(cur, T),
    i.e. result[i, j] = row_i_of([A[i, :], 0, A[i+1, :]])[j + (cur - 1 - i)].

    The per-row left rotation by (cur - 1 - i) is implemented with a
    log2(cur)-stage barrel shifter (static lane rotations + iota/where), so the
    op count is O(log cur) instead of O(cur)."""
    H, cur, T = scores.shape
    dt = scores.dtype

    # Row i of `ext` is [A[i, :], 0, A[i+1, :]]  (tail of the last row is zeros
    # and is never read because its rotation amount is 0).
    below = jnp.concatenate([scores[:, 1:, :], jnp.zeros((H, 1, T), dt)], axis=1)
    ext = jnp.concatenate([scores, jnp.zeros((H, cur, 1), dt), below], axis=2)
    W = 2 * T + 1                                      # ext width; max shift cur-1 < W

    row = lax.broadcasted_iota(jnp.int32, (H, cur, W), 1)
    shift = (cur - 1) - row                            # per-row left-rotation amount

    for bit in range(max(1, (cur - 1).bit_length())):
        k = 1 << bit
        rotated = jnp.concatenate([ext[:, :, k:], ext[:, :, :k]], axis=2)  # rotate left by k
        ext = jnp.where((shift & k) != 0, rotated, ext)

    return ext[:, :, :T]


# -----------------------------------------------------------------------------
# Fused kernel: one program per batch element, all heads batched inside.
# -----------------------------------------------------------------------------
def _mha_xl_kernel(xq_ref, xkv_ref, pos_ref, wq_ref, wk_ref, wv_ref, wp_ref,
                   wo_ref, u_ref, v_ref, o_ref, *, scale, compute_dtype):
    _, cur, d_in = xq_ref.shape
    _, T, _ = xkv_ref.shape
    H, _, d = wq_ref.shape
    f32 = jnp.float32
    cast = (lambda a: a) if compute_dtype is None else (lambda a: a.astype(compute_dtype))

    # Broadcast the (head-shared) activations across heads so every matmul below
    # is a plain batched 'h...' einsum — no in-kernel transposes / reshapes.
    xq = jnp.broadcast_to(cast(xq_ref[0]), (H, cur, d_in))        # (H, cur, d_in)
    xkv = jnp.broadcast_to(cast(xkv_ref[0]), (H, T, d_in))        # (H, T,   d_in)
    pe = jnp.broadcast_to(cast(pos_ref[...]), (H, T, d_in))       # (H, T,   d_in)

    # Projections (MXU, f32 accumulation).
    q = jnp.einsum("hic,hcd->hid", xq, cast(wq_ref[...]), preferred_element_type=f32)
    k = jnp.einsum("hjc,hcd->hjd", xkv, cast(wk_ref[...]), preferred_element_type=f32)
    vv = jnp.einsum("hjc,hcd->hjd", xkv, cast(wv_ref[...]), preferred_element_type=f32)
    p = jnp.einsum("hjc,hcd->hjd", pe, cast(wp_ref[...]), preferred_element_type=f32)

    # Hoisted bias adds (once per program).
    qu = q + u_ref[...].astype(f32)                               # (H, cur, d)
    qv = q + v_ref[...].astype(f32)                               # (H, cur, d)

    # Content / position scores and relative shift.
    content = jnp.einsum("hid,hjd->hij", cast(qu), cast(k), preferred_element_type=f32)
    pos_sc = jnp.einsum("hid,hjd->hij", cast(qv), cast(p), preferred_element_type=f32)
    pos_sc = _rel_shift_heads(pos_sc)

    # Softmax over the key axis (f32 math; reciprocal on the EUP, not a VPU divide).
    logits = (content + pos_sc) * scale                           # (H, cur, T)
    m = jnp.max(logits, axis=-1, keepdims=True)
    e = jnp.exp(logits - m)
    denom = jnp.sum(e, axis=-1, keepdims=True)
    attn = e * pl.reciprocal(denom, approx=False)

    # attn @ V and output projection (per-head partials summed over heads).
    ctx = jnp.einsum("hij,hjd->hid", cast(attn), cast(vv), preferred_element_type=f32)
    parts = jnp.einsum("hid,hdo->hio", cast(ctx), cast(wo_ref[...]), preferred_element_type=f32)
    o_ref[0] = jnp.sum(parts, axis=0).astype(o_ref.dtype)


# -----------------------------------------------------------------------------
# Forward pass: layout plumbing in glue (inputs/weights only), compute in Pallas.
# -----------------------------------------------------------------------------
def mha_xl_forward(input_, pos_embs, memory, u, v, params, n_heads, d_inner,
                   compute_dtype=None):
    cur, bs, d_in = input_.shape
    prev = memory.shape[0]
    T = cur + prev
    H, d = n_heads, d_inner
    HD = H * d
    scale = 1.0 / (d_inner ** 0.5)
    assert pos_embs.shape == (T, 1, d_in)  # module's .view(T, H, d) implies pos batch == 1

    # Activations, batch-major and lane-dense on d_model.
    xq = jnp.transpose(input_, (1, 0, 2))                                   # (bs, cur, d_in)
    xkv = jnp.transpose(jnp.concatenate([memory, input_], axis=0), (1, 0, 2))  # (bs, T, d_in)
    pos2d = pos_embs[:, 0, :]                                               # (T, d_in)

    # Head-major weight layouts (done once, outside the kernel).
    w_q_h = params["w_q"].reshape(d_in, H, d).transpose(1, 0, 2)            # (H, d_in, d)
    w_k_h = params["w_kv"][:, :HD].reshape(d_in, H, d).transpose(1, 0, 2)   # (H, d_in, d)
    w_v_h = params["w_kv"][:, HD:].reshape(d_in, H, d).transpose(1, 0, 2)   # (H, d_in, d)
    w_p_h = params["w_p"].reshape(d_in, H, d).transpose(1, 0, 2)            # (H, d_in, d)
    w_out_h = params["w_out"].reshape(H, d, d_in)                           # (H, d, d_in)
    u3 = u.reshape(H, 1, d)
    v3 = v.reshape(H, 1, d)

    kernel = functools.partial(_mha_xl_kernel, scale=scale, compute_dtype=compute_dtype)
    out = pl.pallas_call(
        kernel,
        grid=(bs,),
        out_shape=jax.ShapeDtypeStruct((bs, cur, d_in), input_.dtype),
        in_specs=[
            pl.BlockSpec((1, cur, d_in), lambda b: (b, 0, 0)),   # xq
            pl.BlockSpec((1, T, d_in), lambda b: (b, 0, 0)),     # xkv
            pl.BlockSpec((T, d_in), lambda b: (0, 0)),           # pos embeddings
            pl.BlockSpec((H, d_in, d), lambda b: (0, 0, 0)),     # w_q
            pl.BlockSpec((H, d_in, d), lambda b: (0, 0, 0)),     # w_k
            pl.BlockSpec((H, d_in, d), lambda b: (0, 0, 0)),     # w_v
            pl.BlockSpec((H, d_in, d), lambda b: (0, 0, 0)),     # w_p
            pl.BlockSpec((H, d, d_in), lambda b: (0, 0, 0)),     # w_out
            pl.BlockSpec((H, 1, d), lambda b: (0, 0, 0)),        # u
            pl.BlockSpec((H, 1, d), lambda b: (0, 0, 0)),        # v
        ],
        out_specs=pl.BlockSpec((1, cur, d_in), lambda b: (b, 0, 0)),
        compiler_params=pltpu.CompilerParams(
            dimension_semantics=("parallel",)),
    )(xq, xkv, pos2d, w_q_h, w_k_h, w_v_h, w_p_h, w_out_h, u3, v3)

    return jnp.transpose(out, (1, 0, 2))                                    # (cur, bs, d_in)


# -----------------------------------------------------------------------------
# Pure-JAX reference (faithful translation of the torch forward, mask=None).
# -----------------------------------------------------------------------------
def reference_forward(input_, pos_embs, memory, u, v, params, n_heads, d_inner):
    cur, bs, d_in = input_.shape
    prev = memory.shape[0]
    T = cur + prev
    H, d = n_heads, d_inner
    scale = 1.0 / (d_inner ** 0.5)

    x = jnp.concatenate([memory, input_], axis=0)
    kv = x @ params["w_kv"]
    k_tfmd, v_tfmd = jnp.split(kv, 2, axis=-1)
    q_tfmd = input_ @ params["w_q"]
    content = jnp.einsum("ibhd,jbhd->ijbh",
                         q_tfmd.reshape(cur, bs, H, d) + u,
                         k_tfmd.reshape(T, bs, H, d))
    p_tfmd = (pos_embs @ params["w_p"]).reshape(T, H, d)
    pos = jnp.einsum("ibhd,jhd->ijbh",
                     q_tfmd.reshape(cur, bs, H, d) + v, p_tfmd)
    zero = jnp.zeros((cur, 1, bs, H), pos.dtype)
    pos = jnp.concatenate([zero, pos], axis=1).reshape(T + 1, cur, bs, H)[1:].reshape(cur, T, bs, H)
    attn = jax.nn.softmax((content + pos) * scale, axis=1)
    awv = jnp.einsum("ijbh,jbhd->ibhd", attn, v_tfmd.reshape(T, bs, H, d)).reshape(cur, bs, H * d)
    return awv @ params["w_out"]


if __name__ == "__main__":
    d_input, d_inner, n_heads = 32, 8, 4
    cur_seq, prev_seq, bs = 8, 8, 2
    T = cur_seq + prev_seq

    key = jax.random.PRNGKey(0)
    ks = jax.random.split(key, 9)
    w_scale = 0.1
    params = {
        "w_kv": jax.random.normal(ks[0], (d_input, 2 * n_heads * d_inner), jnp.float32) * w_scale,
        "w_q": jax.random.normal(ks[1], (d_input, n_heads * d_inner), jnp.float32) * w_scale,
        "w_p": jax.random.normal(ks[2], (d_input, n_heads * d_inner), jnp.float32) * w_scale,
        "w_out": jax.random.normal(ks[3], (n_heads * d_inner, d_input), jnp.float32) * w_scale,
    }
    u = jax.random.normal(ks[4], (n_heads, d_inner), jnp.float32) * w_scale
    v = jax.random.normal(ks[5], (n_heads, d_inner), jnp.float32) * w_scale
    input_ = jax.random.normal(ks[6], (cur_seq, bs, d_input), jnp.float32)
    memory = jax.random.normal(ks[7], (prev_seq, bs, d_input), jnp.float32)
    pos_embs = jax.random.normal(ks[8], (T, 1, d_input), jnp.float32)

    ref = reference_forward(input_, pos_embs, memory, u, v, params, n_heads, d_inner)

    # float32 path (strict tolerance).
    out = mha_xl_forward(input_, pos_embs, memory, u, v, params, n_heads, d_inner)
    out = jax.block_until_ready(out)
    assert out.shape == (cur_seq, bs, d_input)
    if not bool(jnp.allclose(out, ref, atol=1e-4, rtol=1e-4)):
        raise AssertionError("Pallas (float32) output does not match reference")

    # bfloat16 MXU operands, float32 accumulation / softmax (looser tolerance).
    out_bf16 = mha_xl_forward(input_, pos_embs, memory, u, v, params, n_heads,
                              d_inner, compute_dtype=jnp.bfloat16)
    out_bf16 = jax.block_until_ready(out_bf16)
    if not bool(jnp.allclose(out_bf16, ref, atol=5e-2, rtol=5e-2)):
        raise AssertionError("Pallas (bfloat16) output does not match reference")

    print("KERNEL_OK")
</pallas_src>

<mosaic_0001>
module attributes {stable_mosaic.version = 11 : i64} {
  func.func @_mha_xl_kernel(%arg0: i32, %arg1: memref<1x8x32xf32, #tpu.memory_space<vmem>>, %arg2: memref<1x16x32xf32, #tpu.memory_space<vmem>>, %arg3: memref<16x32xf32, #tpu.memory_space<vmem>>, %arg4: memref<4x32x8xf32, #tpu.memory_space<vmem>>, %arg5: memref<4x32x8xf32, #tpu.memory_space<vmem>>, %arg6: memref<4x32x8xf32, #tpu.memory_space<vmem>>, %arg7: memref<4x32x8xf32, #tpu.memory_space<vmem>>, %arg8: memref<4x8x32xf32, #tpu.memory_space<vmem>>, %arg9: memref<4x1x8xf32, #tpu.memory_space<vmem>>, %arg10: memref<4x1x8xf32, #tpu.memory_space<vmem>>, %arg11: memref<1x8x32xf32, #tpu.memory_space<vmem>>) attributes {dimension_semantics = [#tpu.dimension_semantics<parallel>], iteration_bounds = array<i64: 2>, scalar_prefetch = 0 : i64, scratch_operands = 0 : i64, tpu.core_type = #tpu.core_type<tc>, window_params = [{transform_indices = @transform_0, window_bounds = array<i64: 1, 8, 32>}, {transform_indices = @transform_1, window_bounds = array<i64: 1, 16, 32>}, {pipeline_mode = #tpu.pipeline_mode<synchronous>, transform_indices = @transform_2, window_bounds = array<i64: 16, 32>}, {pipeline_mode = #tpu.pipeline_mode<synchronous>, transform_indices = @transform_3, window_bounds = array<i64: 4, 32, 8>}, {pipeline_mode = #tpu.pipeline_mode<synchronous>, transform_indices = @transform_4, window_bounds = array<i64: 4, 32, 8>}, {pipeline_mode = #tpu.pipeline_mode<synchronous>, transform_indices = @transform_5, window_bounds = array<i64: 4, 32, 8>}, {pipeline_mode = #tpu.pipeline_mode<synchronous>, transform_indices = @transform_6, window_bounds = array<i64: 4, 32, 8>}, {pipeline_mode = #tpu.pipeline_mode<synchronous>, transform_indices = @transform_7, window_bounds = array<i64: 4, 8, 32>}, {pipeline_mode = #tpu.pipeline_mode<synchronous>, transform_indices = @transform_8, window_bounds = array<i64: 4, 1, 8>}, {pipeline_mode = #tpu.pipeline_mode<synchronous>, transform_indices = @transform_9, window_bounds = array<i64: 4, 1, 8>}, {transform_indices = @transform_10, window_bounds = array<i64: 1, 8, 32>}]} {
    %c0 = arith.constant 0 : index
    %c0_0 = arith.constant 0 : index
    %c0_1 = arith.constant 0 : index
    %0 = vector.load %arg1[%c0, %c0_0, %c0_1] : memref<1x8x32xf32, #tpu.memory_space<vmem>>, vector<1x8x32xf32>
    %1 = vector.shape_cast %0 : vector<1x8x32xf32> to vector<8x32xf32>
    %2 = vector.shape_cast %1 : vector<8x32xf32> to vector<1x8x32xf32>
    %3 = vector.broadcast %2 : vector<1x8x32xf32> to vector<4x8x32xf32>
    %c0_2 = arith.constant 0 : index
    %c0_3 = arith.constant 0 : index
    %c0_4 = arith.constant 0 : index
    %4 = vector.load %arg2[%c0_2, %c0_3, %c0_4] : memref<1x16x32xf32, #tpu.memory_space<vmem>>, vector<1x16x32xf32>
    %5 = vector.shape_cast %4 : vector<1x16x32xf32> to vector<16x32xf32>
    %6 = vector.shape_cast %5 : vector<16x32xf32> to vector<1x16x32xf32>
    %7 = vector.broadcast %6 : vector<1x16x32xf32> to vector<4x16x32xf32>
    %c0_5 = arith.constant 0 : index
    %c0_6 = arith.constant 0 : index
    %8 = vector.load %arg3[%c0_5, %c0_6] : memref<16x32xf32, #tpu.memory_space<vmem>>, vector<16x32xf32>
    %9 = vector.shape_cast %8 : vector<16x32xf32> to vector<1x16x32xf32>
    %10 = vector.broadcast %9 : vector<1x16x32xf32> to vector<4x16x32xf32>
    %c0_7 = arith.constant 0 : index
    %c0_8 = arith.constant 0 : index
    %c0_9 = arith.constant 0 : index
    %11 = vector.load %arg4[%c0_7, %c0_8, %c0_9] : memref<4x32x8xf32, #tpu.memory_space<vmem>>, vector<4x32x8xf32>
    "tpu.trace_start"() <{level = 10 : i32, message = "hic,hcd->hid"}> : () -> ()
    %cst = arith.constant dense<0.000000e+00> : vector<4x8x8xf32>
    %12 = tpu.matmul %3, %11, %cst {dimension_numbers = #tpu.dot_dimension_numbers<[2], [1], [1], [2], [0, 0, 0, 1, 1, 2], [0], [0]>} : vector<4x8x32xf32>, vector<4x32x8xf32>, vector<4x8x8xf32> -> vector<4x8x8xf32>
    "tpu.trace_stop"() : () -> ()
    %c0_10 = arith.constant 0 : index
    %c0_11 = arith.constant 0 : index
    %c0_12 = arith.constant 0 : index
    %13 = vector.load %arg5[%c0_10, %c0_11, %c0_12] : memref<4x32x8xf32, #tpu.memory_space<vmem>>, vector<4x32x8xf32>
    "tpu.trace_start"() <{level = 10 : i32, message = "hjc,hcd->hjd"}> : () -> ()
    %cst_13 = arith.constant dense<0.000000e+00> : vector<4x16x8xf32>
    %14 = tpu.matmul %7, %13, %cst_13 {dimension_numbers = #tpu.dot_dimension_numbers<[2], [1], [1], [2], [0, 0, 0, 1, 1, 2], [0], [0]>} : vector<4x16x32xf32>, vector<4x32x8xf32>, vector<4x16x8xf32> -> vector<4x16x8xf32>
    "tpu.trace_stop"() : () -> ()
    %c0_14 = arith.constant 0 : index
    %c0_15 = arith.constant 0 : index
    %c0_16 = arith.constant 0 : index
    %15 = vector.load %arg6[%c0_14, %c0_15, %c0_16] : memref<4x32x8xf32, #tpu.memory_space<vmem>>, vector<4x32x8xf32>
    "tpu.trace_start"() <{level = 10 : i32, message = "hjc,hcd->hjd"}> : () -> ()
    %cst_17 = arith.constant dense<0.000000e+00> : vector<4x16x8xf32>
    %16 = tpu.matmul %7, %15, %cst_17 {dimension_numbers = #tpu.dot_dimension_numbers<[2], [1], [1], [2], [0, 0, 0, 1, 1, 2], [0], [0]>} : vector<4x16x32xf32>, vector<4x32x8xf32>, vector<4x16x8xf32> -> vector<4x16x8xf32>
    "tpu.trace_stop"() : () -> ()
    %c0_18 = arith.constant 0 : index
    %c0_19 = arith.constant 0 : index
    %c0_20 = arith.constant 0 : index
    %17 = vector.load %arg7[%c0_18, %c0_19, %c0_20] : memref<4x32x8xf32, #tpu.memory_space<vmem>>, vector<4x32x8xf32>
    "tpu.trace_start"() <{level = 10 : i32, message = "hjc,hcd->hjd"}> : () -> ()
    %cst_21 = arith.constant dense<0.000000e+00> : vector<4x16x8xf32>
    %18 = tpu.matmul %10, %17, %cst_21 {dimension_numbers = #tpu.dot_dimension_numbers<[2], [1], [1], [2], [0, 0, 0, 1, 1, 2], [0], [0]>} : vector<4x16x32xf32>, vector<4x32x8xf32>, vector<4x16x8xf32> -> vector<4x16x8xf32>
    "tpu.trace_stop"() : () -> ()
    %c0_22 = arith.constant 0 : index
    %c0_23 = arith.constant 0 : index
    %c0_24 = arith.constant 0 : index
    %19 = vector.load %arg9[%c0_22, %c0_23, %c0_24] : memref<4x1x8xf32, #tpu.memory_space<vmem>>, vector<4x1x8xf32>
    %20 = vector.broadcast %19 : vector<4x1x8xf32> to vector<4x8x8xf32>
    %21 = arith.addf %12, %20 : vector<4x8x8xf32>
    %c0_25 = arith.constant 0 : index
    %c0_26 = arith.constant 0 : index
    %c0_27 = arith.constant 0 : index
    %22 = vector.load %arg10[%c0_25, %c0_26, %c0_27] : memref<4x1x8xf32, #tpu.memory_space<vmem>>, vector<4x1x8xf32>
    %23 = vector.broadcast %22 : vector<4x1x8xf32> to vector<4x8x8xf32>
    %24 = arith.addf %12, %23 : vector<4x8x8xf32>
    "tpu.trace_start"() <{level = 10 : i32, message = "hid,hjd->hij"}> : () -> ()
    %cst_28 = arith.constant dense<0.000000e+00> : vector<4x8x16xf32>
    %25 = tpu.matmul %21, %14, %cst_28 {dimension_numbers = #tpu.dot_dimension_numbers<[2], [2], [1], [1], [0, 0, 0, 1, 1, 1], [0], [0]>} : vector<4x8x8xf32>, vector<4x16x8xf32>, vector<4x8x16xf32> -> vector<4x8x16xf32>
    %cst_29 = arith.constant dense<0.000000e+00> : vector<4x8x16xf32>
    %26 = tpu.matmul %24, %18, %cst_29 {dimension_numbers = #tpu.dot_dimension_numbers<[2], [2], [1], [1], [0, 0, 0, 1, 1, 1], [0], [0]>} : vector<4x8x8xf32>, vector<4x16x8xf32>, vector<4x8x16xf32> -> vector<4x8x16xf32>
    "tpu.trace_stop"() : () -> ()
    %27 = vector.extract_strided_slice %26 {offsets = [0, 1, 0], sizes = [4, 7, 16], strides = [1, 1, 1]} : vector<4x8x16xf32> to vector<4x7x16xf32>
    %cst_30 = arith.constant 0.000000e+00 : f32
    %28 = vector.broadcast %cst_30 : f32 to vector<4x1x16xf32>
    %29 = tpu.concatenate %27, %28 in 1 : vector<4x7x16xf32>, vector<4x1x16xf32> -> vector<4x8x16xf32>
    %cst_31 = arith.constant 0.000000e+00 : f32
    %30 = vector.broadcast %cst_31 : f32 to vector<4x8x1xf32>
    %31 = tpu.concatenate %26, %30, %29 in 2 : vector<4x8x16xf32>, vector<4x8x1xf32>, vector<4x8x16xf32> -> vector<4x8x33xf32>
    %32 = tpu.iota {dimensions = array<i32: 1>} : vector<4x8x33xi32>
    %c7_i32 = arith.constant 7 : i32
    %33 = vector.broadcast %c7_i32 : i32 to vector<4x8x33xi32>
    %34 = arith.subi %33, %32 : vector<4x8x33xi32>
    %35 = vector.extract_strided_slice %31 {offsets = [0, 0, 1], sizes = [4, 8, 32], strides = [1, 1, 1]} : vector<4x8x33xf32> to vector<4x8x32xf32>
    %36 = vector.extract_strided_slice %31 {offsets = [0, 0, 0], sizes = [4, 8, 1], strides = [1, 1, 1]} : vector<4x8x33xf32> to vector<4x8x1xf32>
    %37 = tpu.concatenate %35, %36 in 2 : vector<4x8x32xf32>, vector<4x8x1xf32> -> vector<4x8x33xf32>
    %c1_i32 = arith.constant 1 : i32
    %38 = vector.broadcast %c1_i32 : i32 to vector<4x8x33xi32>
    %39 = arith.andi %34, %38 : vector<4x8x33xi32>
    %c0_i32 = arith.constant 0 : i32
    %40 = vector.broadcast %c0_i32 : i32 to vector<4x8x33xi32>
    %41 = arith.cmpi ne, %39, %40 : vector<4x8x33xi32>
    %42 = arith.select %41, %37, %31 : vector<4x8x33xi1>, vector<4x8x33xf32>
    %43 = vector.extract_strided_slice %42 {offsets = [0, 0, 2], sizes = [4, 8, 31], strides = [1, 1, 1]} : vector<4x8x33xf32> to vector<4x8x31xf32>
    %44 = vector.extract_strided_slice %42 {offsets = [0, 0, 0], sizes = [4, 8, 2], strides = [1, 1, 1]} : vector<4x8x33xf32> to vector<4x8x2xf32>
    %45 = tpu.concatenate %43, %44 in 2 : vector<4x8x31xf32>, vector<4x8x2xf32> -> vector<4x8x33xf32>
    %c2_i32 = arith.constant 2 : i32
    %46 = vector.broadcast %c2_i32 : i32 to vector<4x8x33xi32>
    %47 = arith.andi %34, %46 : vector<4x8x33xi32>
    %c0_i32_32 = arith.constant 0 : i32
    %48 = vector.broadcast %c0_i32_32 : i32 to vector<4x8x33xi32>
    %49 = arith.cmpi ne, %47, %48 : vector<4x8x33xi32>
    %50 = arith.select %49, %45, %42 : vector<4x8x33xi1>, vector<4x8x33xf32>
    %51 = vector.extract_strided_slice %50 {offsets = [0, 0, 4], sizes = [4, 8, 29], strides = [1, 1, 1]} : vector<4x8x33xf32> to vector<4x8x29xf32>
    %52 = vector.extract_strided_slice %50 {offsets = [0, 0, 0], sizes = [4, 8, 4], strides = [1, 1, 1]} : vector<4x8x33xf32> to vector<4x8x4xf32>
    %53 = tpu.concatenate %51, %52 in 2 : vector<4x8x29xf32>, vector<4x8x4xf32> -> vector<4x8x33xf32>
    %c4_i32 = arith.constant 4 : i32
    %54 = vector.broadcast %c4_i32 : i32 to vector<4x8x33xi32>
    %55 = arith.andi %34, %54 : vector<4x8x33xi32>
    %c0_i32_33 = arith.constant 0 : i32
    %56 = vector.broadcast %c0_i32_33 : i32 to vector<4x8x33xi32>
    %57 = arith.cmpi ne, %55, %56 : vector<4x8x33xi32>
    %58 = arith.select %57, %53, %50 : vector<4x8x33xi1>, vector<4x8x33xf32>
    %59 = vector.extract_strided_slice %58 {offsets = [0, 0, 0], sizes = [4, 8, 16], strides = [1, 1, 1]} : vector<4x8x33xf32> to vector<4x8x16xf32>
    %60 = arith.addf %25, %59 : vector<4x8x16xf32>
    %cst_34 = arith.constant 0.353553385 : f32
    %61 = vector.broadcast %cst_34 : f32 to vector<4x8x16xf32>
    %62 = arith.mulf %60, %61 : vector<4x8x16xf32>
    %cst_35 = arith.constant dense<0xFF800000> : vector<4x8xf32>
    %63 = vector.multi_reduction <maximumf>, %62, %cst_35 [2] : vector<4x8x16xf32> to vector<4x8xf32>
    %64 = vector.shape_cast %63 : vector<4x8xf32> to vector<4x8x1xf32>
    %65 = vector.broadcast %64 : vector<4x8x1xf32> to vector<4x8x16xf32>
    %66 = arith.subf %62, %65 : vector<4x8x16xf32>
    %67 = math.exp %66 : vector<4x8x16xf32>
    %cst_36 = arith.constant dense<0.000000e+00> : vector<4x8xf32>
    %68 = vector.multi_reduction <add>, %67, %cst_36 [2] : vector<4x8x16xf32> to vector<4x8xf32>
    %69 = vector.shape_cast %68 : vector<4x8xf32> to vector<4x8x1xf32>
    %70 = tpu.reciprocal %69 : vector<4x8x1xf32> -> vector<4x8x1xf32>
    %71 = vector.broadcast %70 : vector<4x8x1xf32> to vector<4x8x16xf32>
    %72 = arith.mulf %67, %71 : vector<4x8x16xf32>
    "tpu.trace_start"() <{level = 10 : i32, message = "hij,hjd->hid"}> : () -> ()
    %cst_37 = arith.constant dense<0.000000e+00> : vector<4x8x8xf32>
    %73 = tpu.matmul %72, %16, %cst_37 {dimension_numbers = #tpu.dot_dimension_numbers<[2], [1], [1], [2], [0, 0, 0, 1, 1, 2], [0], [0]>} : vector<4x8x16xf32>, vector<4x16x8xf32>, vector<4x8x8xf32> -> vector<4x8x8xf32>
    "tpu.trace_stop"() : () -> ()
    %c0_38 = arith.constant 0 : index
    %c0_39 = arith.constant 0 : index
    %c0_40 = arith.constant 0 : index
    %74 = vector.load %arg8[%c0_38, %c0_39, %c0_40] : memref<4x8x32xf32, #tpu.memory_space<vmem>>, vector<4x8x32xf32>
    "tpu.trace_start"() <{level = 10 : i32, message = "hid,hdo->hio"}> : () -> ()
    %cst_41 = arith.constant dense<0.000000e+00> : vector<4x8x32xf32>
    %75 = tpu.matmul %73, %74, %cst_41 {dimension_numbers = #tpu.dot_dimension_numbers<[2], [1], [1], [2], [0, 0, 0, 1, 1, 2], [0], [0]>} : vector<4x8x8xf32>, vector<4x8x32xf32>, vector<4x8x32xf32> -> vector<4x8x32xf32>
    "tpu.trace_stop"() : () -> ()
    %cst_42 = arith.constant dense<0.000000e+00> : vector<8x32xf32>
    %76 = vector.multi_reduction <add>, %75, %cst_42 [0] : vector<4x8x32xf32> to vector<8x32xf32>
    %c0_43 = arith.constant 0 : index
    %c0_44 = arith.constant 0 : index
    %c0_45 = arith.constant 0 : index
    %77 = vector.load %arg11[%c0_43, %c0_44, %c0_45] : memref<1x8x32xf32, #tpu.memory_space<vmem>>, vector<1x8x32xf32>
    %78 = vector.shape_cast %77 : vector<1x8x32xf32> to vector<8x32xf32>
    %79 = vector.shape_cast %76 : vector<8x32xf32> to vector<1x8x32xf32>
    tpu.vector_store %arg11[%c0_43, %c0_44, %c0_45], %79 {strides = array<i32>} : memref<1x8x32xf32, #tpu.memory_space<vmem>>, vector<1x8x32xf32>,
    return
  }
  func.func @transform_0(%arg0: i32) -> (i32, i32, i32) {
    %c0_i32 = arith.constant 0 : i32
    %c0_i32_0 = arith.constant 0 : i32
    %c0_i32_1 = arith.constant 0 : i32
    return %arg0, %c0_i32, %c0_i32_0 : i32, i32, i32
  }
  func.func @transform_1(%arg0: i32) -> (i32, i32, i32) {
    %c0_i32 = arith.constant 0 : i32
    %c0_i32_0 = arith.constant 0 : i32
    %c0_i32_1 = arith.constant 0 : i32
    return %arg0, %c0_i32, %c0_i32_0 : i32, i32, i32
  }
  func.func @transform_2(%arg0: i32) -> (i32, i32) {
    %c0_i32 = arith.constant 0 : i32
    %c0_i32_0 = arith.constant 0 : i32
    %c0_i32_1 = arith.constant 0 : i32
    return %c0_i32, %c0_i32_0 : i32, i32
  }
  func.func @transform_3(%arg0: i32) -> (i32, i32, i32) {
    %c0_i32 = arith.constant 0 : i32
    %c0_i32_0 = arith.constant 0 : i32
    %c0_i32_1 = arith.constant 0 : i32
    %c0_i32_2 = arith.constant 0 : i32
    return %c0_i32, %c0_i32_0, %c0_i32_1 : i32, i32, i32
  }
  func.func @transform_4(%arg0: i32) -> (i32, i32, i32) {
    %c0_i32 = arith.constant 0 : i32
    %c0_i32_0 = arith.constant 0 : i32
    %c0_i32_1 = arith.constant 0 : i32
    %c0_i32_2 = arith.constant 0 : i32
    return %c0_i32, %c0_i32_0, %c0_i32_1 : i32, i32, i32
  }
  func.func @transform_5(%arg0: i32) -> (i32, i32, i32) {
    %c0_i32 = arith.constant 0 : i32
    %c0_i32_0 = arith.constant 0 : i32
    %c0_i32_1 = arith.constant 0 : i32
    %c0_i32_2 = arith.constant 0 : i32
    return %c0_i32, %c0_i32_0, %c0_i32_1 : i32, i32, i32
  }
  func.func @transform_6(%arg0: i32) -> (i32, i32, i32) {
    %c0_i32 = arith.constant 0 : i32
    %c0_i32_0 = arith.constant 0 : i32
    %c0_i32_1 = arith.constant 0 : i32
    %c0_i32_2 = arith.constant 0 : i32
    return %c0_i32, %c0_i32_0, %c0_i32_1 : i32, i32, i32
  }
  func.func @transform_7(%arg0: i32) -> (i32, i32, i32) {
    %c0_i32 = arith.constant 0 : i32
    %c0_i32_0 = arith.constant 0 : i32
    %c0_i32_1 = arith.constant 0 : i32
    %c0_i32_2 = arith.constant 0 : i32
    return %c0_i32, %c0_i32_0, %c0_i32_1 : i32, i32, i32
  }
  func.func @transform_8(%arg0: i32) -> (i32, i32, i32) {
    %c0_i32 = arith.constant 0 : i32
    %c0_i32_0 = arith.constant 0 : i32
    %c0_i32_1 = arith.constant 0 : i32
    %c0_i32_2 = arith.constant 0 : i32
    return %c0_i32, %c0_i32_0, %c0_i32_1 : i32, i32, i32
  }
  func.func @transform_9(%arg0: i32) -> (i32, i32, i32) {
    %c0_i32 = arith.constant 0 : i32
    %c0_i32_0 = arith.constant 0 : i32
    %c0_i32_1 = arith.constant 0 : i32
    %c0_i32_2 = arith.constant 0 : i32
    return %c0_i32, %c0_i32_0, %c0_i32_1 : i32, i32, i32
  }
  func.func @transform_10(%arg0: i32) -> (i32, i32, i32) {
    %c0_i32 = arith.constant 0 : i32
    %c0_i32_0 = arith.constant 0 : i32
    %c0_i32_1 = arith.constant 0 : i32
    return %arg0, %c0_i32, %c0_i32_0 : i32, i32, i32
  }
}

</mosaic_0001>

<llo_original>
// kernel: tpu_custom_call.1
$region0: #{tpu_custom_call.1}
  #allocation0 [shape = 'u32[]', space=smem, size = 0x4, offset = 0x4, fixed_abs, tag = 'smem constant byte address 0x4 - core index']
  #allocation1 [shape = 'u32[72,128]{1,0:T(1,128)}', space=vmem, size = 0x9000, scoped, tag = 'internal scratch']
  %s0 = inlined_call_operand.vmem [shape: f32[2,8,32], index: 0, kind: input, shape index: {}]
  %s1 = inlined_call_operand.vmem [shape: f32[2,16,32], index: 1, kind: input, shape index: {}]
  %s2 = inlined_call_operand.vmem [shape: f32[16,32], index: 2, kind: input, shape index: {}]
  %s3 = inlined_call_operand.vmem [shape: f32[4,32,8], index: 3, kind: input, shape index: {}]
  %s4 = inlined_call_operand.vmem [shape: f32[4,32,8], index: 4, kind: input, shape index: {}]
  %s5 = inlined_call_operand.vmem [shape: f32[4,32,8], index: 5, kind: input, shape index: {}]
  %s6 = inlined_call_operand.vmem [shape: f32[4,32,8], index: 6, kind: input, shape index: {}]
  %s7 = inlined_call_operand.vmem [shape: f32[4,8,32], index: 7, kind: input, shape index: {}]
  %s8 = inlined_call_operand.vmem [shape: f32[4,1,8], index: 8, kind: input, shape index: {}]
  %s9 = inlined_call_operand.vmem [shape: f32[4,1,8], index: 9, kind: input, shape index: {}]
  %s10 = inlined_call_operand.hbm [shape: f32[2,8,32], index: 10, kind: output, shape index: {}]
  %s11 = sld [smem:[#allocation0]]
  $region73: #{tpu_custom_call.1} parent=0
    _
  %s13 = ssub.s32 1, %s11
  %s14 = scalar_select 0, %s13, %s11
  $region1: #{tpu_custom_call.1} parent=0
    #allocation2 [shape = 'u8[8192]{0}', space=vmem, size = 0x2000, scoped, tag = 'output window, operand 0']
    #allocation3 [shape = 's32[2]{0}', space=sflag, size = 0x8, scoped, tag = 'scoped memory for tpu_custom_call.1']
    %15 = vsyncpa [#allocation3], 0
    %s16 = scalar_lea.sflag [#allocation3], 1
    %17 = vsyncpa %s16, 0
    loop: start=0, step=1, limit=4
    $region2: #{tpu_custom_call.1} parent=1 // loop_pre_header
      _
    $region3: #{tpu_custom_call.1} parent=1 // loop_header
      %s19 = sphi 0, %s23
      %p20 = scmp.ge.s32.totalorder %s19, 4
      %s29 = sphi 0, %s31
      %s32 = sphi 0, %s29
      %s33 = sphi 0, %s32
      %s49 = sphi 0, %s33
      %s55 = sphi 0, %s57
      %s58 = sphi 0, %s55
      %s59 = sphi 0, %s58
      %s75 = sphi 0, %s59
      %s79 = sphi 0, %s79
      %s81 = sphi 0, %s79
      %s82 = sphi 0, %s81
      %s96 = sphi 0, %s82
      %s100 = sphi 0, %s100
      %s102 = sphi 0, %s100
      %s103 = sphi 0, %s102
      %s117 = sphi 0, %s103
      %s121 = sphi 0, %s121
      %s123 = sphi 0, %s121
      %s124 = sphi 0, %s123
      %s138 = sphi 0, %s124
      %s142 = sphi 0, %s142
      %s144 = sphi 0, %s142
      %s145 = sphi 0, %s144
      %s159 = sphi 0, %s145
      %s163 = sphi 0, %s163
      %s165 = sphi 0, %s163
      %s166 = sphi 0, %s165
      %s180 = sphi 0, %s166
      %s184 = sphi 0, %s184
      %s186 = sphi 0, %s184
      %s187 = sphi 0, %s186
      %s201 = sphi 0, %s187
      %s205 = sphi 0, %s205
      %s207 = sphi 0, %s205
      %s208 = sphi 0, %s207
      %s222 = sphi 0, %s208
      %s226 = sphi 0, %s226
      %s228 = sphi 0, %s226
      %s229 = sphi 0, %s228
      %s243 = sphi 0, %s229
      %s249 = sphi 0, %s251
      %s252 = sphi 0, %s249
      %s253 = sphi 0, %s252
      %s269 = sphi 0, %s253
    $region4: #{tpu_custom_call.1} parent=1 // loop_header_branch
      %22 = sbr.rel (%p20) target = $region8
    $region5: #{tpu_custom_call.1} parent=1 // loop_body
      %s24 = ssub.s32 %s19, 1
      %s25 = ssub.s32 %s19, 2
      %s26 = sadd.s32 %s19, 1
      %s27 = ssub.s32 %s19, %s26
      %p28 = scmp.eq.s32.totalorder %s27, 0
      %s30 = sadd.s32 %s29, 1
      %s31 = scalar_select %p28, %s29, %s30
      %p34 = pneg %p28
      %p35 = scmp.eq.s32.totalorder %s19, 1
      %p36 = por %p34, %p35
      %p37 = scmp.ne.s32.totalorder %s29, %s32
      %p38 = scmp.eq.s32.totalorder %s19, 0
      %p39 = por %p37, %p38
      %p40 = scmp.ne.s32.totalorder %s29, %s32
      %p41 = scmp.eq.s32.totalorder %s24, 1
      %p42 = por %p40, %p41
      %p43 = scmp.ne.s32.totalorder %s32, %s33
      %p44 = scmp.eq.s32.totalorder %s24, 0
      %p45 = por %p43, %p44
      %p46 = scmp.ne.s32.totalorder %s32, %s33
      %p47 = scmp.eq.s32.totalorder %s25, 1
      %p48 = por %p46, %p47
      %p50 = scmp.ne.s32.totalorder %s33, %s49
      %p51 = scmp.eq.s32.totalorder %s25, 0
      %p52 = por %p50, %p51
      %s53 = ssub.s32 %s19, %s26
      %p54 = scmp.eq.s32.totalorder %s53, 0
      %s56 = sadd.s32 %s55, 1
      %s57 = scalar_select %p54, %s55, %s56
      %p60 = pneg %p54
      %p61 = scmp.eq.s32.totalorder %s19, 1
      %p62 = por %p60, %p61
      %p63 = scmp.ne.s32.totalorder %s55, %s58
      %p64 = scmp.eq.s32.totalorder %s19, 0
      %p65 = por %p63, %p64
      %p66 = scmp.ne.s32.totalorder %s55, %s58
      %p67 = scmp.eq.s32.totalorder %s24, 1
      %p68 = por %p66, %p67
      %p69 = scmp.ne.s32.totalorder %s58, %s59
      %p70 = scmp.eq.s32.totalorder %s24, 0
      %p71 = por %p69, %p70
      %p72 = scmp.ne.s32.totalorder %s58, %s59
      %p73 = scmp.eq.s32.totalorder %s25, 1
      %p74 = por %p72, %p73
      %p76 = scmp.ne.s32.totalorder %s59, %s75
      %p77 = scmp.eq.s32.totalorder %s25, 0
      %p78 = por %p76, %p77
      %s80 = sadd.s32 %s79, 1
      %p83 = scmp.eq.s32.totalorder %s19, 1
      %p84 = scmp.ne.s32.totalorder %s79, %s81
      %p85 = scmp.eq.s32.totalorder %s19, 0
      %p86 = por %p84, %p85
      %p87 = scmp.ne.s32.totalorder %s79, %s81
      %p88 = scmp.eq.s32.totalorder %s24, 1
      %p89 = por %p87, %p88
      %p90 = scmp.ne.s32.totalorder %s81, %s82
      %p91 = scmp.eq.s32.totalorder %s24, 0
      %p92 = por %p90, %p91
      %p93 = scmp.ne.s32.totalorder %s81, %s82
      %p94 = scmp.eq.s32.totalorder %s25, 1
      %p95 = por %p93, %p94
      %p97 = scmp.ne.s32.totalorder %s82, %s96
      %p98 = scmp.eq.s32.totalorder %s25, 0
      %p99 = por %p97, %p98
      %s101 = sadd.s32 %s100, 1
      %p104 = scmp.eq.s32.totalorder %s19, 1
      %p105 = scmp.ne.s32.totalorder %s100, %s102
      %p106 = scmp.eq.s32.totalorder %s19, 0
      %p107 = por %p105, %p106
      %p108 = scmp.ne.s32.totalorder %s100, %s102
      %p109 = scmp.eq.s32.totalorder %s24, 1
      %p110 = por %p108, %p109
      %p111 = scmp.ne.s32.totalorder %s102, %s103
      %p112 = scmp.eq.s32.totalorder %s24, 0
      %p113 = por %p111, %p112
      %p114 = scmp.ne.s32.totalorder %s102, %s103
      %p115 = scmp.eq.s32.totalorder %s25, 1
      %p116 = por %p114, %p115
      %p118 = scmp.ne.s32.totalorder %s103, %s117
      %p119 = scmp.eq.s32.totalorder %s25, 0
      %p120 = por %p118, %p119
      %s122 = sadd.s32 %s121, 1
      %p125 = scmp.eq.s32.totalorder %s19, 1
      %p126 = scmp.ne.s32.totalorder %s121, %s123
      %p127 = scmp.eq.s32.totalorder %s19, 0
      %p128 = por %p126, %p127
      %p129 = scmp.ne.s32.totalorder %s121, %s123
      %p130 = scmp.eq.s32.totalorder %s24, 1
      %p131 = por %p129, %p130
      %p132 = scmp.ne.s32.totalorder %s123, %s124
      %p133 = scmp.eq.s32.totalorder %s24, 0
      %p134 = por %p132, %p133
      %p135 = scmp.ne.s32.totalorder %s123, %s124
      %p136 = scmp.eq.s32.totalorder %s25, 1
      %p137 = por %p135, %p136
      %p139 = scmp.ne.s32.totalorder %s124, %s138
      %p140 = scmp.eq.s32.totalorder %s25, 0
      %p141 = por %p139, %p140
      %s143 = sadd.s32 %s142, 1
      %p146 = scmp.eq.s32.totalorder %s19, 1
      %p147 = scmp.ne.s32.totalorder %s142, %s144
      %p148 = scmp.eq.s32.totalorder %s19, 0
      %p149 = por %p147, %p148
      %p150 = scmp.ne.s32.totalorder %s142, %s144
      %p151 = scmp.eq.s32.totalorder %s24, 1
      %p152 = por %p150, %p151
      %p153 = scmp.ne.s32.totalorder %s144, %s145
      %p154 = scmp.eq.s32.totalorder %s24, 0
      %p155 = por %p153, %p154
      %p156 = scmp.ne.s32.totalorder %s144, %s145
      %p157 = scmp.eq.s32.totalorder %s25, 1
      %p158 = por %p156, %p157
      %p160 = scmp.ne.s32.totalorder %s145, %s159
      %p161 = scmp.eq.s32.totalorder %s25, 0
      %p162 = por %p160, %p161
      %s164 = sadd.s32 %s163, 1
      %p167 = scmp.eq.s32.totalorder %s19, 1
      %p168 = scmp.ne.s32.totalorder %s163, %s165
      %p169 = scmp.eq.s32.totalorder %s19, 0
      %p170 = por %p168, %p169
      %p171 = scmp.ne.s32.totalorder %s163, %s165
      %p172 = scmp.eq.s32.totalorder %s24, 1
      %p173 = por %p171, %p172
      %p174 = scmp.ne.s32.totalorder %s165, %s166
      %p175 = scmp.eq.s32.totalorder %s24, 0
      %p176 = por %p174, %p175
      %p177 = scmp.ne.s32.totalorder %s165, %s166
      %p178 = scmp.eq.s32.totalorder %s25, 1
      %p179 = por %p177, %p178
      %p181 = scmp.ne.s32.totalorder %s166, %s180
      %p182 = scmp.eq.s32.totalorder %s25, 0
      %p183 = por %p181, %p182
      %s185 = sadd.s32 %s184, 1
      %p188 = scmp.eq.s32.totalorder %s19, 1
      %p189 = scmp.ne.s32.totalorder %s184, %s186
      %p190 = scmp.eq.s32.totalorder %s19, 0
      %p191 = por %p189, %p190
      %p192 = scmp.ne.s32.totalorder %s184, %s186
      %p193 = scmp.eq.s32.totalorder %s24, 1
      %p194 = por %p192, %p193
      %p195 = scmp.ne.s32.totalorder %s186, %s187
      %p196 = scmp.eq.s32.totalorder %s24, 0
      %p197 = por %p195, %p196
      %p198 = scmp.ne.s32.totalorder %s186, %s187
      %p199 = scmp.eq.s32.totalorder %s25, 1
      %p200 = por %p198, %p199
      %p202 = scmp.ne.s32.totalorder %s187, %s201
      %p203 = scmp.eq.s32.totalorder %s25, 0
      %p204 = por %p202, %p203
      %s206 = sadd.s32 %s205, 1
      %p209 = scmp.eq.s32.totalorder %s19, 1
      %p210 = scmp.ne.s32.totalorder %s205, %s207
      %p211 = scmp.eq.s32.totalorder %s19, 0
      %p212 = por %p210, %p211
      %p213 = scmp.ne.s32.totalorder %s205, %s207
      %p214 = scmp.eq.s32.totalorder %s24, 1
      %p215 = por %p213, %p214
      %p216 = scmp.ne.s32.totalorder %s207, %s208
      %p217 = scmp.eq.s32.totalorder %s24, 0
      %p218 = por %p216, %p217
      %p219 = scmp.ne.s32.totalorder %s207, %s208
      %p220 = scmp.eq.s32.totalorder %s25, 1
      %p221 = por %p219, %p220
      %p223 = scmp.ne.s32.totalorder %s208, %s222
      %p224 = scmp.eq.s32.totalorder %s25, 0
      %p225 = por %p223, %p224
      %s227 = sadd.s32 %s226, 1
      %p230 = scmp.eq.s32.totalorder %s19, 1
      %p231 = scmp.ne.s32.totalorder %s226, %s228
      %p232 = scmp.eq.s32.totalorder %s19, 0
      %p233 = por %p231, %p232
      %p234 = scmp.ne.s32.totalorder %s226, %s228
      %p235 = scmp.eq.s32.totalorder %s24, 1
      %p236 = por %p234, %p235
      %p237 = scmp.ne.s32.totalorder %s228, %s229
      %p238 = scmp.eq.s32.totalorder %s24, 0
      %p239 = por %p237, %p238
      %p240 = scmp.ne.s32.totalorder %s228, %s229
      %p241 = scmp.eq.s32.totalorder %s25, 1
      %p242 = por %p240, %p241
      %p244 = scmp.ne.s32.totalorder %s229, %s243
      %p245 = scmp.eq.s32.totalorder %s25, 0
      %p246 = por %p244, %p245
      %s247 = ssub.s32 %s19, %s26
      %p248 = scmp.eq.s32.totalorder %s247, 0
      %s250 = sadd.s32 %s249, 1
      %s251 = scalar_select %p248, %s249, %s250
      %p254 = pneg %p248
      %p255 = scmp.eq.s32.totalorder %s19, 1
      %p256 = por %p254, %p255
      %p257 = scmp.ne.s32.totalorder %s249, %s252
      %p258 = scmp.eq.s32.totalorder %s19, 0
      %p259 = por %p257, %p258
      %p260 = scmp.ne.s32.totalorder %s249, %s252
      %p261 = scmp.eq.s32.totalorder %s24, 1
      %p262 = por %p260, %p261
      %p263 = scmp.ne.s32.totalorder %s252, %s253
      %p264 = scmp.eq.s32.totalorder %s24, 0
      %p265 = por %p263, %p264
      %p266 = scmp.ne.s32.totalorder %s252, %s253
      %p267 = scmp.eq.s32.totalorder %s25, 1
      %p268 = por %p266, %p267
      %p270 = scmp.ne.s32.totalorder %s253, %s269
      %p271 = scmp.eq.s32.totalorder %s25, 0
      %p272 = por %p270, %p271
      %p273 = scmp.le.s32.totalorder 1, %s19
      %p274 = scmp.lt.s32.totalorder %s19, 3
      %p275 = pnand %p273, %p274
      %p276 = pneg %p275
      // Predicated region
      $region9: #{tpu_custom_call.1} parent=5 // pred_check
        _
      $region10: #{tpu_custom_call.1} parent=5 // pred_check_branch
        %278 = sbr.rel (%p275) target = $region12
      $region11: #{tpu_custom_call.1} parent=5 // pred_region
        %s279 = ssub.s32 %s19, 1
        // Predicated region
        $region13: #{tpu_custom_call.1} parent=11 // pred_check
          %p280 = pneg %p92
        $region14: #{tpu_custom_call.1} parent=11 // pred_check_branch
          %282 = sbr.rel (%p280) target = $region16
        $region15: #{tpu_custom_call.1} parent=11 // pred_region
          _
        $region16: #{tpu_custom_call.1} parent=11 // pred_fallthru
          _
        // Predicated region
        $region17: #{tpu_custom_call.1} parent=11 // pred_check
          %p283 = pneg %p113
        $region18: #{tpu_custom_call.1} parent=11 // pred_check_branch
          %285 = sbr.rel (%p283) target = $region20
        $region19: #{tpu_custom_call.1} parent=11 // pred_region
          _
        $region20: #{tpu_custom_call.1} parent=11 // pred_fallthru
          _
        // Predicated region
        $region21: #{tpu_custom_call.1} parent=11 // pred_check
          %p286 = pneg %p134
        $region22: #{tpu_custom_call.1} parent=11 // pred_check_branch
          %288 = sbr.rel (%p286) target = $region24
        $region23: #{tpu_custom_call.1} parent=11 // pred_region
          _
        $region24: #{tpu_custom_call.1} parent=11 // pred_fallthru
          _
        // Predicated region
        $region25: #{tpu_custom_call.1} parent=11 // pred_check
          %p289 = pneg %p155
        $region26: #{tpu_custom_call.1} parent=11 // pred_check_branch
          %291 = sbr.rel (%p289) target = $region28
        $region27: #{tpu_custom_call.1} parent=11 // pred_region
          _
        $region28: #{tpu_custom_call.1} parent=11 // pred_fallthru
          _
        // Predicated region
        $region29: #{tpu_custom_call.1} parent=11 // pred_check
          %p292 = pneg %p176
        $region30: #{tpu_custom_call.1} parent=11 // pred_check_branch
          %294 = sbr.rel (%p292) target = $region32
        $region31: #{tpu_custom_call.1} parent=11 // pred_region
          _
        $region32: #{tpu_custom_call.1} parent=11 // pred_fallthru
          _
        // Predicated region
        $region33: #{tpu_custom_call.1} parent=11 // pred_check
          %p295 = pneg %p197
        $region34: #{tpu_custom_call.1} parent=11 // pred_check_branch
          %297 = sbr.rel (%p295) target = $region36
        $region35: #{tpu_custom_call.1} parent=11 // pred_region
          _
        $region36: #{tpu_custom_call.1} parent=11 // pred_fallthru
          _
        // Predicated region
        $region37: #{tpu_custom_call.1} parent=11 // pred_check
          %p298 = pneg %p218
        $region38: #{tpu_custom_call.1} parent=11 // pred_check_branch
          %300 = sbr.rel (%p298) target = $region40
        $region39: #{tpu_custom_call.1} parent=11 // pred_region
          _
        $region40: #{tpu_custom_call.1} parent=11 // pred_fallthru
          _
        // Predicated region
        $region41: #{tpu_custom_call.1} parent=11 // pred_check
          %p301 = pneg %p239
        $region42: #{tpu_custom_call.1} parent=11 // pred_check_branch
          %303 = sbr.rel (%p301) target = $region44
        $region43: #{tpu_custom_call.1} parent=11 // pred_region
          _
        $region44: #{tpu_custom_call.1} parent=11 // pred_fallthru
          _
      $region12: #{tpu_custom_call.1} parent=5 // pred_fallthru
        _
      %p304 = scmp.lt.s32.totalorder %s19, 2
      // Predicated region
      $region45: #{tpu_custom_call.1} parent=5 // pred_check
        %p305 = pneg %p304
      $region46: #{tpu_custom_call.1} parent=5 // pred_check_branch
        %307 = sbr.rel (%p305) target = $region48
      $region47: #{tpu_custom_call.1} parent=5 // pred_region
        // Predicated region
        $region49: #{tpu_custom_call.1} parent=47 // pred_check
          %p308 = pneg %p39
        $region50: #{tpu_custom_call.1} parent=47 // pred_check_branch
          %310 = sbr.rel (%p308) target = $region52
        $region51: #{tpu_custom_call.1} parent=47 // pred_region
          %p311 = scmp.lt.s32.totalorder %s19, 1
          %s312 = scalar_select %p311, %s19, 1
          %s313 = smul.addr %s312, 8
          %s314 = scalar_lea.vmem %s0, %s313
        $region52: #{tpu_custom_call.1} parent=47 // pred_fallthru
          _
        // Predicated region
        $region53: #{tpu_custom_call.1} parent=47 // pred_check
          %p315 = pneg %p65
        $region54: #{tpu_custom_call.1} parent=47 // pred_check_branch
          %317 = sbr.rel (%p315) target = $region56
        $region55: #{tpu_custom_call.1} parent=47 // pred_region
          %p318 = scmp.lt.s32.totalorder %s19, 1
          %s319 = scalar_select %p318, %s19, 1
          %s320 = smul.addr %s319, 2
          %s321 = smul.addr %s320, 8
          %s322 = scalar_lea.vmem %s1, %s321
        $region56: #{tpu_custom_call.1} parent=47 // pred_fallthru
          _
      $region48: #{tpu_custom_call.1} parent=5 // pred_fallthru
        _
      %p323 = scmp.le.s32.totalorder 1, %s19
      %p324 = scmp.lt.s32.totalorder %s19, 3
      %p325 = pnand %p323, %p324
      %p326 = pneg %p325
      // Predicated region
      $region57: #{tpu_custom_call.1} parent=5 // pred_check
        _
      $region58: #{tpu_custom_call.1} parent=5 // pred_check_branch
        %328 = sbr.rel (%p325) target = $region60
      $region59: #{tpu_custom_call.1} parent=5 // pred_region
        %s329 = ssub.s32 %s19, 1
        %p330 = scmp.lt.s32.totalorder %s24, 1
        %s331 = scalar_select %p330, %s24, 1
        %s332 = smul.addr %s331, 8
        %s333 = scalar_lea.vmem %s0, %s332
        %p334 = pneg %p45
        %p335 = pneg %p42
        %p336 = scmp.lt.s32.totalorder %s24, 1
        %s337 = scalar_select %p336, %s24, 1
        %s338 = smul.addr %s337, 2
        %s339 = smul.addr %s338, 8
        %s340 = scalar_lea.vmem %s1, %s339
        %p341 = pneg %p71
        %p342 = pneg %p68
        %p343 = pneg %p92
        %p344 = pneg %p89
        %p345 = pneg %p113
        %p346 = pneg %p110
        %p347 = pneg %p134
        %p348 = pneg %p131
        %p349 = pneg %p155
        %p350 = pneg %p152
        %p351 = pneg %p176
        %p352 = pneg %p173
        %p353 = pneg %p197
        %p354 = pneg %p194
        %p355 = pneg %p218
        %p356 = pneg %p215
        %p357 = pneg %p239
        %p358 = pneg %p236
        %p359 = pneg %p265
        %p360 = pneg %p262
        %s361 = sand.u32 %s252, 1
        %s362 = scalar_lea.sflag [#allocation3], %s361
        %s363 = sand.u32 %s252, 1
        %s364 = smul.addr %s363, 8
        %s365 = scalar_lea.vmem [#allocation2], %s364
        %p366 = scmp.lt.s32.totalorder %s24, 1
        %s367 = scalar_select %p366, %s24, 1
        %s368 = smul.addr %s367, 8
        %s369 = scalar_lea.vmem %s0, %s368
        %p370 = scmp.lt.s32.totalorder %s24, 1
        %s371 = scalar_select %p370, %s24, 1
        %s372 = smul.addr %s371, 2
        %s373 = smul.addr %s372, 8
        %s374 = scalar_lea.vmem %s1, %s373
        %v375 = vld [vmem:[%s369] sm:$0xff]
        %v376 = vld [vmem:[%s374] sm:$0xff]
        %v377 = vld [vmem:[%s374 + $0x8] sm:$0xff]
        %v378 = vld [vmem:[%s2] sm:$0xff]
        %v379 = vld [vmem:[%s2 + $0x8] sm:$0xff]
        %v380 = vld [vmem:[%s3] sm:$0xff]
        %v381 = vld [vmem:[%s3 + $0x8] sm:$0xff]
        %v382 = vld [vmem:[%s3 + $0x10] sm:$0xff]
        %v383 = vld [vmem:[%s3 + $0x18] sm:$0xff]
        %v384 = vld [vmem:[%s3 + $0x20] sm:$0xff]
        %v385 = vld [vmem:[%s3 + $0x28] sm:$0xff]
        %v386 = vld [vmem:[%s3 + $0x30] sm:$0xff]
        %v387 = vld [vmem:[%s3 + $0x38] sm:$0xff]
        %v388 = vld [vmem:[%s3 + $0x40] sm:$0xff]
        %v389 = vld [vmem:[%s3 + $0x48] sm:$0xff]
        %v390 = vld [vmem:[%s3 + $0x50] sm:$0xff]
        %v391 = vld [vmem:[%s3 + $0x58] sm:$0xff]
        %v392 = vld [vmem:[%s3 + $0x60] sm:$0xff]
        %v393 = vld [vmem:[%s3 + $0x68] sm:$0xff]
        %v394 = vld [vmem:[%s3 + $0x70] sm:$0xff]
        %v395 = vld [vmem:[%s3 + $0x78] sm:$0xff]
        %vm396 = vcmask 261120
        %v398 = vsel %vm396, %v375, 0
        %400 = vmatpush.msra.mxu0 0.0
        %401 = vmatpush.msra.mxu0 0.0
        %402 = vmatpush.msra.mxu0 0.0
        %403 = vmatpush.msra.mxu0 0.0
        %404 = vmatpush.msra.mxu0 0.0
        %405 = vmatpush.msra.mxu0 0.0
        %406 = vmatpush.msra.mxu0 0.0
        %407 = vmatpush.msra.mxu0 0.0
        %408 = vmatpush.msra.mxu0 0.0
        %409 = vmatpush.msra.mxu0 0.0
        %410 = vmatpush.msra.mxu0 0.0
        %411 = vmatpush.msra.mxu0 0.0
        %412 = vmatpush.msra.mxu0 %v383
        %413 = vmatpush.msra.mxu0 %v382
        %414 = vmatpush.msra.mxu0 %v381
        %415 = vmatpush.msra.mxu0 %v380
        %416 = vmatmul.f32.gmra.mxu0 %v398
        %v417 = vpop.f32.mrf.mxu0
        %v418 = vadd.f32 0.0, %v417
        %419 = vdwg.mxu0
        %420 = vmatpush.msra.mxu0 0.0
        %421 = vmatpush.msra.mxu0 0.0
        %422 = vmatpush.msra.mxu0 0.0
        %423 = vmatpush.msra.mxu0 0.0
        %424 = vmatpush.msra.mxu0 0.0
        %425 = vmatpush.msra.mxu0 0.0
        %426 = vmatpush.msra.mxu0 0.0
        %427 = vmatpush.msra.mxu0 0.0
        %428 = vmatpush.msra.mxu0 0.0
        %429 = vmatpush.msra.mxu0 0.0
        %430 = vmatpush.msra.mxu0 0.0
        %431 = vmatpush.msra.mxu0 0.0
        %432 = vmatpush.msra.mxu0 %v387
        %433 = vmatpush.msra.mxu0 %v386
        %434 = vmatpush.msra.mxu0 %v385
        %435 = vmatpush.msra.mxu0 %v384
        %436 = vmatmul.f32.gmra.mxu0 %v398
        %v437 = vpop.f32.mrf.mxu0
        %v438 = vadd.f32 0.0, %v437
        %439 = vdwg.mxu0
        %440 = vmatpush.msra.mxu0 0.0
        %441 = vmatpush.msra.mxu0 0.0
        %442 = vmatpush.msra.mxu0 0.0
        %443 = vmatpush.msra.mxu0 0.0
        %444 = vmatpush.msra.mxu0 0.0
        %445 = vmatpush.msra.mxu0 0.0
        %446 = vmatpush.msra.mxu0 0.0
        %447 = vmatpush.msra.mxu0 0.0
        %448 = vmatpush.msra.mxu0 0.0
        %449 = vmatpush.msra.mxu0 0.0
        %450 = vmatpush.msra.mxu0 0.0
        %451 = vmatpush.msra.mxu0 0.0
        %452 = vmatpush.msra.mxu0 %v391
        %453 = vmatpush.msra.mxu0 %v390
        %454 = vmatpush.msra.mxu0 %v389
        %455 = vmatpush.msra.mxu0 %v388
        %456 = vmatmul.f32.gmra.mxu0 %v398
        %v457 = vpop.f32.mrf.mxu0
        %v458 = vadd.f32 0.0, %v457
        %459 = vdwg.mxu0
        %460 = vmatpush.msra.mxu0 0.0
        %461 = vmatpush.msra.mxu0 0.0
        %462 = vmatpush.msra.mxu0 0.0
        %463 = vmatpush.msra.mxu0 0.0
        %464 = vmatpush.msra.mxu0 0.0
        %465 = vmatpush.msra.mxu0 0.0
        %466 = vmatpush.msra.mxu0 0.0
        %467 = vmatpush.msra.mxu0 0.0
        %468 = vmatpush.msra.mxu0 0.0
        %469 = vmatpush.msra.mxu0 0.0
        %470 = vmatpush.msra.mxu0 0.0
        %471 = vmatpush.msra.mxu0 0.0
        %472 = vmatpush.msra.mxu0 %v395
        %473 = vmatpush.msra.mxu0 %v394
        %474 = vmatpush.msra.mxu0 %v393
        %475 = vmatpush.msra.mxu0 %v392
        %476 = vmatmul.f32.gmra.mxu0 %v398
        %v477 = vpop.f32.mrf.mxu0
        %v478 = vadd.f32 0.0, %v477
        %479 = vdwg.mxu0
        %v480 = vld [vmem:[%s4] sm:$0xff]
        %v481 = vld [vmem:[%s4 + $0x8] sm:$0xff]
        %v482 = vld [vmem:[%s4 + $0x10] sm:$0xff]
        %v483 = vld [vmem:[%s4 + $0x18] sm:$0xff]
        %v484 = vld [vmem:[%s4 + $0x20] sm:$0xff]
        %v485 = vld [vmem:[%s4 + $0x28] sm:$0xff]
        %v486 = vld [vmem:[%s4 + $0x30] sm:$0xff]
        %v487 = vld [vmem:[%s4 + $0x38] sm:$0xff]
        %v488 = vld [vmem:[%s4 + $0x40] sm:$0xff]
        %v489 = vld [vmem:[%s4 + $0x48] sm:$0xff]
        %v490 = vld [vmem:[%s4 + $0x50] sm:$0xff]
        %v491 = vld [vmem:[%s4 + $0x58] sm:$0xff]
        %v492 = vld [vmem:[%s4 + $0x60] sm:$0xff]
        %v493 = vld [vmem:[%s4 + $0x68] sm:$0xff]
        %v494 = vld [vmem:[%s4 + $0x70] sm:$0xff]
        %v495 = vld [vmem:[%s4 + $0x78] sm:$0xff]
        %v497 = vsel %vm396, %v376, 0
        %v500 = vsel %vm396, %v377, 0
        %502 = vmatpush.msra.mxu0 0.0
        %503 = vmatpush.msra.mxu0 0.0
        %504 = vmatpush.msra.mxu0 0.0
        %505 = vmatpush.msra.mxu0 0.0
        %506 = vmatpush.msra.mxu0 0.0
        %507 = vmatpush.msra.mxu0 0.0
        %508 = vmatpush.msra.mxu0 0.0
        %509 = vmatpush.msra.mxu0 0.0
        %510 = vmatpush.msra.mxu0 0.0
        %511 = vmatpush.msra.mxu0 0.0
        %512 = vmatpush.msra.mxu0 0.0
        %513 = vmatpush.msra.mxu0 0.0
        %514 = vmatpush.msra.mxu0 %v483
        %515 = vmatpush.msra.mxu0 %v482
        %516 = vmatpush.msra.mxu0 %v481
        %517 = vmatpush.msra.mxu0 %v480
        %518 = vmatmul.f32.gmra.mxu0 %v497
        %v519 = vpop.f32.mrf.mxu0
        %v520 = vadd.f32 0.0, %v519
        %521 = vmatmul.f32.gmra.mxu0 %v500
        %v522 = vpop.f32.mrf.mxu0
        %v523 = vadd.f32 0.0, %v522
        %524 = vdwg.mxu0
        %525 = vmatpush.msra.mxu0 0.0
        %526 = vmatpush.msra.mxu0 0.0
        %527 = vmatpush.msra.mxu0 0.0
        %528 = vmatpush.msra.mxu0 0.0
        %529 = vmatpush.msra.mxu0 0.0
        %530 = vmatpush.msra.mxu0 0.0
        %531 = vmatpush.msra.mxu0 0.0
        %532 = vmatpush.msra.mxu0 0.0
        %533 = vmatpush.msra.mxu0 0.0
        %534 = vmatpush.msra.mxu0 0.0
        %535 = vmatpush.msra.mxu0 0.0
        %536 = vmatpush.msra.mxu0 0.0
        %537 = vmatpush.msra.mxu0 %v487
        %538 = vmatpush.msra.mxu0 %v486
        %539 = vmatpush.msra.mxu0 %v485
        %540 = vmatpush.msra.mxu0 %v484
        %541 = vmatmul.f32.gmra.mxu0 %v497
        %v542 = vpop.f32.mrf.mxu0
        %v543 = vadd.f32 0.0, %v542
        %544 = vmatmul.f32.gmra.mxu0 %v500
        %v545 = vpop.f32.mrf.mxu0
        %v546 = vadd.f32 0.0, %v545
        %547 = vdwg.mxu0
        %548 = vmatpush.msra.mxu0 0.0
        %549 = vmatpush.msra.mxu0 0.0
        %550 = vmatpush.msra.mxu0 0.0
        %551 = vmatpush.msra.mxu0 0.0
        %552 = vmatpush.msra.mxu0 0.0
        %553 = vmatpush.msra.mxu0 0.0
        %554 = vmatpush.msra.mxu0 0.0
        %555 = vmatpush.msra.mxu0 0.0
        %556 = vmatpush.msra.mxu0 0.0
        %557 = vmatpush.msra.mxu0 0.0
        %558 = vmatpush.msra.mxu0 0.0
        %559 = vmatpush.msra.mxu0 0.0
        %560 = vmatpush.msra.mxu0 %v491
        %561 = vmatpush.msra.mxu0 %v490
        %562 = vmatpush.msra.mxu0 %v489
        %563 = vmatpush.msra.mxu0 %v488
        %564 = vmatmul.f32.gmra.mxu0 %v497
        %v565 = vpop.f32.mrf.mxu0
        %v566 = vadd.f32 0.0, %v565
        %567 = vmatmul.f32.gmra.mxu0 %v500
        %v568 = vpop.f32.mrf.mxu0
        %v569 = vadd.f32 0.0, %v568
        %570 = vdwg.mxu0
        %571 = vmatpush.msra.mxu0 0.0
        %572 = vmatpush.msra.mxu0 0.0
        %573 = vmatpush.msra.mxu0 0.0
        %574 = vmatpush.msra.mxu0 0.0
        %575 = vmatpush.msra.mxu0 0.0
        %576 = vmatpush.msra.mxu0 0.0
        %577 = vmatpush.msra.mxu0 0.0
        %578 = vmatpush.msra.mxu0 0.0
        %579 = vmatpush.msra.mxu0 0.0
        %580 = vmatpush.msra.mxu0 0.0
        %581 = vmatpush.msra.mxu0 0.0
        %582 = vmatpush.msra.mxu0 0.0
        %583 = vmatpush.msra.mxu0 %v495
        %584 = vmatpush.msra.mxu0 %v494
        %585 = vmatpush.msra.mxu0 %v493
        %586 = vmatpush.msra.mxu0 %v492
        %587 = vmatmul.f32.gmra.mxu0 %v497
        %v588 = vpop.f32.mrf.mxu0
        %v589 = vadd.f32 0.0, %v588
        %590 = vmatmul.f32.gmra.mxu0 %v500
        %v591 = vpop.f32.mrf.mxu0
        %v592 = vadd.f32 0.0, %v591
        %593 = vdwg.mxu0
        %v594 = vld [vmem:[%s5] sm:$0xff]
        %v595 = vld [vmem:[%s5 + $0x8] sm:$0xff]
        %v596 = vld [vmem:[%s5 + $0x10] sm:$0xff]
        %v597 = vld [vmem:[%s5 + $0x18] sm:$0xff]
        %v598 = vld [vmem:[%s5 + $0x20] sm:$0xff]
        %v599 = vld [vmem:[%s5 + $0x28] sm:$0xff]
        %v600 = vld [vmem:[%s5 + $0x30] sm:$0xff]
        %v601 = vld [vmem:[%s5 + $0x38] sm:$0xff]
        %v602 = vld [vmem:[%s5 + $0x40] sm:$0xff]
        %v603 = vld [vmem:[%s5 + $0x48] sm:$0xff]
        %v604 = vld [vmem:[%s5 + $0x50] sm:$0xff]
        %v605 = vld [vmem:[%s5 + $0x58] sm:$0xff]
        %v606 = vld [vmem:[%s5 + $0x60] sm:$0xff]
        %v607 = vld [vmem:[%s5 + $0x68] sm:$0xff]
        %v608 = vld [vmem:[%s5 + $0x70] sm:$0xff]
        %v609 = vld [vmem:[%s5 + $0x78] sm:$0xff]
        %610 = vmatpush.msra.mxu0 0.0
        %611 = vmatpush.msra.mxu0 0.0
        %612 = vmatpush.msra.mxu0 0.0
        %613 = vmatpush.msra.mxu0 0.0
        %614 = vmatpush.msra.mxu0 0.0
        %615 = vmatpush.msra.mxu0 0.0
        %616 = vmatpush.msra.mxu0 0.0
        %617 = vmatpush.msra.mxu0 0.0
        %618 = vmatpush.msra.mxu0 0.0
        %619 = vmatpush.msra.mxu0 0.0
        %620 = vmatpush.msra.mxu0 0.0
        %621 = vmatpush.msra.mxu0 0.0
        %622 = vmatpush.msra.mxu0 %v597
        %623 = vmatpush.msra.mxu0 %v596
        %624 = vmatpush.msra.mxu0 %v595
        %625 = vmatpush.msra.mxu0 %v594
        %626 = vmatmul.f32.gmra.mxu0 %v497
        %v627 = vpop.f32.mrf.mxu0
        %v628 = vadd.f32 0.0, %v627
        %629 = vmatmul.f32.gmra.mxu0 %v500
        %v630 = vpop.f32.mrf.mxu0
        %v631 = vadd.f32 0.0, %v630
        %632 = vdwg.mxu0
        %633 = vmatpush.msra.mxu0 0.0
        %634 = vmatpush.msra.mxu0 0.0
        %635 = vmatpush.msra.mxu0 0.0
        %636 = vmatpush.msra.mxu0 0.0
        %637 = vmatpush.msra.mxu0 0.0
        %638 = vmatpush.msra.mxu0 0.0
        %639 = vmatpush.msra.mxu0 0.0
        %640 = vmatpush.msra.mxu0 0.0
        %641 = vmatpush.msra.mxu0 0.0
        %642 = vmatpush.msra.mxu0 0.0
        %643 = vmatpush.msra.mxu0 0.0
        %644 = vmatpush.msra.mxu0 0.0
        %645 = vmatpush.msra.mxu0 %v601
        %646 = vmatpush.msra.mxu0 %v600
        %647 = vmatpush.msra.mxu0 %v599
        %648 = vmatpush.msra.mxu0 %v598
        %649 = vmatmul.f32.gmra.mxu0 %v497
        %v650 = vpop.f32.mrf.mxu0
        %v651 = vadd.f32 0.0, %v650
        %652 = vmatmul.f32.gmra.mxu0 %v500
        %v653 = vpop.f32.mrf.mxu0
        %v654 = vadd.f32 0.0, %v653
        %655 = vdwg.mxu0
        %656 = vmatpush.msra.mxu0 0.0
        %657 = vmatpush.msra.mxu0 0.0
        %658 = vmatpush.msra.mxu0 0.0
        %659 = vmatpush.msra.mxu0 0.0
        %660 = vmatpush.msra.mxu0 0.0
        %661 = vmatpush.msra.mxu0 0.0
        %662 = vmatpush.msra.mxu0 0.0
        %663 = vmatpush.msra.mxu0 0.0
        %664 = vmatpush.msra.mxu0 0.0
        %665 = vmatpush.msra.mxu0 0.0
        %666 = vmatpush.msra.mxu0 0.0
        %667 = vmatpush.msra.mxu0 0.0
        %668 = vmatpush.msra.mxu0 %v605
        %669 = vmatpush.msra.mxu0 %v604
        %670 = vmatpush.msra.mxu0 %v603
        %671 = vmatpush.msra.mxu0 %v602
        %672 = vmatmul.f32.gmra.mxu0 %v497
        %v673 = vpop.f32.mrf.mxu0
        %v674 = vadd.f32 0.0, %v673
        %675 = vmatmul.f32.gmra.mxu0 %v500
        %v676 = vpop.f32.mrf.mxu0
        %v677 = vadd.f32 0.0, %v676
        %678 = vdwg.mxu0
        %679 = vmatpush.msra.mxu0 0.0
        %680 = vmatpush.msra.mxu0 0.0
        %681 = vmatpush.msra.mxu0 0.0
        %682 = vmatpush.msra.mxu0 0.0
        %683 = vmatpush.msra.mxu0 0.0
        %684 = vmatpush.msra.mxu0 0.0
        %685 = vmatpush.msra.mxu0 0.0
        %686 = vmatpush.msra.mxu0 0.0
        %687 = vmatpush.msra.mxu0 0.0
        %688 = vmatpush.msra.mxu0 0.0
        %689 = vmatpush.msra.mxu0 0.0
        %690 = vmatpush.msra.mxu0 0.0
        %691 = vmatpush.msra.mxu0 %v609
        %692 = vmatpush.msra.mxu0 %v608
        %693 = vmatpush.msra.mxu0 %v607
        %694 = vmatpush.msra.mxu0 %v606
        %695 = vmatmul.f32.gmra.mxu0 %v497
        %v696 = vpop.f32.mrf.mxu0
        %v697 = vadd.f32 0.0, %v696
        %698 = vmatmul.f32.gmra.mxu0 %v500
        %v699 = vpop.f32.mrf.mxu0
        %v700 = vadd.f32 0.0, %v699
        %701 = vdwg.mxu0
        %v702 = vld [vmem:[%s6] sm:$0xff]
        %v703 = vld [vmem:[%s6 + $0x8] sm:$0xff]
        %v704 = vld [vmem:[%s6 + $0x10] sm:$0xff]
        %v705 = vld [vmem:[%s6 + $0x18] sm:$0xff]
        %v706 = vld [vmem:[%s6 + $0x20] sm:$0xff]
        %v707 = vld [vmem:[%s6 + $0x28] sm:$0xff]
        %v708 = vld [vmem:[%s6 + $0x30] sm:$0xff]
        %v709 = vld [vmem:[%s6 + $0x38] sm:$0xff]
        %v710 = vld [vmem:[%s6 + $0x40] sm:$0xff]
        %v711 = vld [vmem:[%s6 + $0x48] sm:$0xff]
        %v712 = vld [vmem:[%s6 + $0x50] sm:$0xff]
        %v713 = vld [vmem:[%s6 + $0x58] sm:$0xff]
        %v714 = vld [vmem:[%s6 + $0x60] sm:$0xff]
        %v715 = vld [vmem:[%s6 + $0x68] sm:$0xff]
        %v716 = vld [vmem:[%s6 + $0x70] sm:$0xff]
        %v717 = vld [vmem:[%s6 + $0x78] sm:$0xff]
        %v719 = vsel %vm396, %v378, 0
        %v722 = vsel %vm396, %v379, 0
        %724 = vmatpush.msra.mxu0 0.0
        %725 = vmatpush.msra.mxu0 0.0
        %726 = vmatpush.msra.mxu0 0.0
        %727 = vmatpush.msra.mxu0 0.0
        %728 = vmatpush.msra.mxu0 0.0
        %729 = vmatpush.msra.mxu0 0.0
        %730 = vmatpush.msra.mxu0 0.0
        %731 = vmatpush.msra.mxu0 0.0
        %732 = vmatpush.msra.mxu0 0.0
        %733 = vmatpush.msra.mxu0 0.0
        %734 = vmatpush.msra.mxu0 0.0
        %735 = vmatpush.msra.mxu0 0.0
        %736 = vmatpush.msra.mxu0 %v705
        %737 = vmatpush.msra.mxu0 %v704
        %738 = vmatpush.msra.mxu0 %v703
        %739 = vmatpush.msra.mxu0 %v702
        %740 = vmatmul.f32.gmra.mxu0 %v719
        %v741 = vpop.f32.mrf.mxu0
        %v742 = vadd.f32 0.0, %v741
        %743 = vmatmul.f32.gmra.mxu0 %v722
        %v744 = vpop.f32.mrf.mxu0
        %v745 = vadd.f32 0.0, %v744
        %746 = vdwg.mxu0
        %747 = vmatpush.msra.mxu0 0.0
        %748 = vmatpush.msra.mxu0 0.0
        %749 = vmatpush.msra.mxu0 0.0
        %750 = vmatpush.msra.mxu0 0.0
        %751 = vmatpush.msra.mxu0 0.0
        %752 = vmatpush.msra.mxu0 0.0
        %753 = vmatpush.msra.mxu0 0.0
        %754 = vmatpush.msra.mxu0 0.0
        %755 = vmatpush.msra.mxu0 0.0
        %756 = vmatpush.msra.mxu0 0.0
        %757 = vmatpush.msra.mxu0 0.0
        %758 = vmatpush.msra.mxu0 0.0
        %759 = vmatpush.msra.mxu0 %v709
        %760 = vmatpush.msra.mxu0 %v708
        %761 = vmatpush.msra.mxu0 %v707
        %762 = vmatpush.msra.mxu0 %v706
        %763 = vmatmul.f32.gmra.mxu0 %v719
        %v764 = vpop.f32.mrf.mxu0
        %v765 = vadd.f32 0.0, %v764
        %766 = vmatmul.f32.gmra.mxu0 %v722
        %v767 = vpop.f32.mrf.mxu0
        %v768 = vadd.f32 0.0, %v767
        %769 = vdwg.mxu0
        %770 = vmatpush.msra.mxu0 0.0
        %771 = vmatpush.msra.mxu0 0.0
        %772 = vmatpush.msra.mxu0 0.0
        %773 = vmatpush.msra.mxu0 0.0
        %774 = vmatpush.msra.mxu0 0.0
        %775 = vmatpush.msra.mxu0 0.0
        %776 = vmatpush.msra.mxu0 0.0
        %777 = vmatpush.msra.mxu0 0.0
        %778 = vmatpush.msra.mxu0 0.0
        %779 = vmatpush.msra.mxu0 0.0
        %780 = vmatpush.msra.mxu0 0.0
        %781 = vmatpush.msra.mxu0 0.0
        %782 = vmatpush.msra.mxu0 %v713
        %783 = vmatpush.msra.mxu0 %v712
        %784 = vmatpush.msra.mxu0 %v711
        %785 = vmatpush.msra.mxu0 %v710
        %786 = vmatmul.f32.gmra.mxu0 %v719
        %v787 = vpop.f32.mrf.mxu0
        %v788 = vadd.f32 0.0, %v787
        %789 = vmatmul.f32.gmra.mxu0 %v722
        %v790 = vpop.f32.mrf.mxu0
        %v791 = vadd.f32 0.0, %v790
        %792 = vdwg.mxu0
        %793 = vmatpush.msra.mxu0 0.0
        %794 = vmatpush.msra.mxu0 0.0
        %795 = vmatpush.msra.mxu0 0.0
        %796 = vmatpush.msra.mxu0 0.0
        %797 = vmatpush.msra.mxu0 0.0
        %798 = vmatpush.msra.mxu0 0.0
        %799 = vmatpush.msra.mxu0 0.0
        %800 = vmatpush.msra.mxu0 0.0
        %801 = vmatpush.msra.mxu0 0.0
        %802 = vmatpush.msra.mxu0 0.0
        %803 = vmatpush.msra.mxu0 0.0
        %804 = vmatpush.msra.mxu0 0.0
        %805 = vmatpush.msra.mxu0 %v717
        %806 = vmatpush.msra.mxu0 %v716
        %807 = vmatpush.msra.mxu0 %v715
        %808 = vmatpush.msra.mxu0 %v714
        %809 = vmatmul.f32.gmra.mxu0 %v719
        %v810 = vpop.f32.mrf.mxu0
        %v811 = vadd.f32 0.0, %v810
        %812 = vmatmul.f32.gmra.mxu0 %v722
        %v813 = vpop.f32.mrf.mxu0
        %v814 = vadd.f32 0.0, %v813
        %815 = vdwg.mxu0
        %v816 = vld [vmem:[%s8] sm:$0x1]
        %v817 = vld [vmem:[%s8 + $0x1] sm:$0x1]
        %v818 = vld [vmem:[%s8 + $0x2] sm:$0x1]
        %v819 = vld [vmem:[%s8 + $0x3] sm:$0x1]
        %v824 = vperm.slane %v816, 0
        %v825 = vperm.slane %v817, 0
        %v826 = vperm.slane %v818, 0
        %v827 = vperm.slane %v819, 0
        %v832 = vadd.f32 %v418, %v824
        %v833 = vadd.f32 %v438, %v825
        %v834 = vadd.f32 %v458, %v826
        %v835 = vadd.f32 %v478, %v827
        %v836 = vld [vmem:[%s9] sm:$0x1]
        %v837 = vld [vmem:[%s9 + $0x1] sm:$0x1]
        %v838 = vld [vmem:[%s9 + $0x2] sm:$0x1]
        %v839 = vld [vmem:[%s9 + $0x3] sm:$0x1]
        %v844 = vperm.slane %v836, 0
        %v845 = vperm.slane %v837, 0
        %v846 = vperm.slane %v838, 0
        %v847 = vperm.slane %v839, 0
        %v852 = vadd.f32 %v418, %v844
        %v853 = vadd.f32 %v438, %v845
        %v854 = vadd.f32 %v458, %v846
        %v855 = vadd.f32 %v478, %v847
        %vm856 = vcmask 64512
        %v858 = vsel %vm856, %v852, 0
        %v861 = vsel %vm856, %v742, 0
        %v864 = vsel %vm856, %v745, 0
        %866 = vmatpush.xpose.msra.mxu0 0.0
        %867 = vmatpush.xpose.msra.mxu0 0.0
        %868 = vmatpush.xpose.msra.mxu0 0.0
        %869 = vmatpush.xpose.msra.mxu0 0.0
        %870 = vmatpush.xpose.msra.mxu0 0.0
        %871 = vmatpush.xpose.msra.mxu0 0.0
        %872 = vmatpush.xpose.msra.mxu0 0.0
        %873 = vmatpush.xpose.msra.mxu0 0.0
        %874 = vmatpush.xpose.msra.mxu0 0.0
        %875 = vmatpush.xpose.msra.mxu0 0.0
        %876 = vmatpush.xpose.msra.mxu0 0.0
        %877 = vmatpush.xpose.msra.mxu0 0.0
        %878 = vmatpush.xpose.msra.mxu0 0.0
        %879 = vmatpush.xpose.msra.mxu0 0.0
        %880 = vmatpush.xpose.msra.mxu0 %v864
        %881 = vmatpush.xpose.msra.mxu0 %v861
        %882 = vmatmul.f32.gmra.mxu0 %v858
        %v883 = vpop.f32.mrf.mxu0
        %v884 = vadd.f32 0.0, %v883
        %885 = vdwg.mxu0
        %v887 = vsel %vm856, %v853, 0
        %v890 = vsel %vm856, %v765, 0
        %v893 = vsel %vm856, %v768, 0
        %895 = vmatpush.xpose.msra.mxu0 0.0
        %896 = vmatpush.xpose.msra.mxu0 0.0
        %897 = vmatpush.xpose.msra.mxu0 0.0
        %898 = vmatpush.xpose.msra.mxu0 0.0
        %899 = vmatpush.xpose.msra.mxu0 0.0
        %900 = vmatpush.xpose.msra.mxu0 0.0
        %901 = vmatpush.xpose.msra.mxu0 0.0
        %902 = vmatpush.xpose.msra.mxu0 0.0
        %903 = vmatpush.xpose.msra.mxu0 0.0
        %904 = vmatpush.xpose.msra.mxu0 0.0
        %905 = vmatpush.xpose.msra.mxu0 0.0
        %906 = vmatpush.xpose.msra.mxu0 0.0
        %907 = vmatpush.xpose.msra.mxu0 0.0
        %908 = vmatpush.xpose.msra.mxu0 0.0
        %909 = vmatpush.xpose.msra.mxu0 %v893
        %910 = vmatpush.xpose.msra.mxu0 %v890
        %911 = vmatmul.f32.gmra.mxu0 %v887
        %v912 = vpop.f32.mrf.mxu0
        %v913 = vadd.f32 0.0, %v912
        %914 = vdwg.mxu0
        %v916 = vsel %vm856, %v854, 0
        %v919 = vsel %vm856, %v788, 0
        %v922 = vsel %vm856, %v791, 0
        %924 = vmatpush.xpose.msra.mxu0 0.0
        %925 = vmatpush.xpose.msra.mxu0 0.0
        %926 = vmatpush.xpose.msra.mxu0 0.0
        %927 = vmatpush.xpose.msra.mxu0 0.0
        %928 = vmatpush.xpose.msra.mxu0 0.0
        %929 = vmatpush.xpose.msra.mxu0 0.0
        %930 = vmatpush.xpose.msra.mxu0 0.0
        %931 = vmatpush.xpose.msra.mxu0 0.0
        %932 = vmatpush.xpose.msra.mxu0 0.0
        %933 = vmatpush.xpose.msra.mxu0 0.0
        %934 = vmatpush.xpose.msra.mxu0 0.0
        %935 = vmatpush.xpose.msra.mxu0 0.0
        %936 = vmatpush.xpose.msra.mxu0 0.0
        %937 = vmatpush.xpose.msra.mxu0 0.0
        %938 = vmatpush.xpose.msra.mxu0 %v922
        %939 = vmatpush.xpose.msra.mxu0 %v919
        %940 = vmatmul.f32.gmra.mxu0 %v916
        %v941 = vpop.f32.mrf.mxu0
        %v942 = vadd.f32 0.0, %v941
        %943 = vdwg.mxu0
        %v945 = vsel %vm856, %v855, 0
        %v948 = vsel %vm856, %v811, 0
        %v951 = vsel %vm856, %v814, 0
        %953 = vmatpush.xpose.msra.mxu0 0.0
        %954 = vmatpush.xpose.msra.mxu0 0.0
        %955 = vmatpush.xpose.msra.mxu0 0.0
        %956 = vmatpush.xpose.msra.mxu0 0.0
        %957 = vmatpush.xpose.msra.mxu0 0.0
        %958 = vmatpush.xpose.msra.mxu0 0.0
        %959 = vmatpush.xpose.msra.mxu0 0.0
        %960 = vmatpush.xpose.msra.mxu0 0.0
        %961 = vmatpush.xpose.msra.mxu0 0.0
        %962 = vmatpush.xpose.msra.mxu0 0.0
        %963 = vmatpush.xpose.msra.mxu0 0.0
        %964 = vmatpush.xpose.msra.mxu0 0.0
        %965 = vmatpush.xpose.msra.mxu0 0.0
        %966 = vmatpush.xpose.msra.mxu0 0.0
        %967 = vmatpush.xpose.msra.mxu0 %v951
        %968 = vmatpush.xpose.msra.mxu0 %v948
        %969 = vmatmul.f32.gmra.mxu0 %v945
        %v970 = vpop.f32.mrf.mxu0
        %v971 = vadd.f32 0.0, %v970
        %972 = vdwg.mxu0
        %v977 = vrot.slane %v884, 1
        %v978 = vrot.slane %v913, 1
        %v979 = vrot.slane %v942, 1
        %v980 = vrot.slane %v971, 1
        %vm985 = vcmask 1046528
        %v986 = vsel %vm985, %v977, 0.0
        %v987 = vsel %vm985, %v978, 0.0
        %v988 = vsel %vm985, %v979, 0.0
        %v989 = vsel %vm985, %v980, 0.0
        %994 = vrot.lane.b32.xlu0 %v986, 17
        %v995 = vpop.permute.xlu0 %994
        %996 = vrot.lane.b32.xlu0 %v987, 17
        %v997 = vpop.permute.xlu0 %996
        %998 = vrot.lane.b32.xlu0 %v988, 17
        %v999 = vpop.permute.xlu0 %998
        %1000 = vrot.lane.b32.xlu0 %v989, 17
        %v1001 = vpop.permute.xlu0 %1000
        %vm1006 = vcmask 130048
        %v1007 = vsel %vm1006, %v884, 0.0
        %v1008 = vsel %vm1006, %v913, 0.0
        %v1009 = vsel %vm1006, %v942, 0.0
        %v1010 = vsel %vm1006, %v971, 0.0
        %vm1011 = vcmask 138240
        %v1012 = vsel %vm1011, %v1007, %v995
        %v1013 = vsel %vm1011, %v1008, %v997
        %v1014 = vsel %vm1011, %v1009, %v999
        %v1015 = vsel %vm1011, %v1010, %v1001
        %v1016 = vlaneseq
        %v1017 = vshrl.u32 %v1016, 7
        %v1018 = vsub.s32 7, %v1017
        %1023 = vrot.lane.b32.xlu0 %v1012, 127
        %v1024 = vpop.permute.xlu0 %1023
        %1025 = vrot.lane.b32.xlu0 %v1013, 127
        %v1026 = vpop.permute.xlu0 %1025
        %1027 = vrot.lane.b32.xlu0 %v1014, 127
        %v1028 = vpop.permute.xlu0 %1027
        %1029 = vrot.lane.b32.xlu0 %v1015, 127
        %v1030 = vpop.permute.xlu0 %1029
        %1035 = vrot.lane.b32.xlu0 %v1012, 32
        %v1036 = vpop.permute.xlu0 %1035
        %1037 = vrot.lane.b32.xlu0 %v1013, 32
        %v1038 = vpop.permute.xlu0 %1037
        %1039 = vrot.lane.b32.xlu0 %v1014, 32
        %v1040 = vpop.permute.xlu0 %1039
        %1041 = vrot.lane.b32.xlu0 %v1015, 32
        %v1042 = vpop.permute.xlu0 %1041
        %v1047 = vsel %vm396, %v1024, %v1036
        %v1048 = vsel %vm396, %v1026, %v1038
        %v1049 = vsel %vm396, %v1028, %v1040
        %v1050 = vsel %vm396, %v1030, %v1042
        %v1051 = vand.u32 %v1018, 1
        %vm1052 = vcmp.ne.s32.totalorder %v1051, 0
        %v1053 = vsel %vm1052, %v1047, %v1012
        %v1054 = vsel %vm1052, %v1048, %v1013
        %v1055 = vsel %vm1052, %v1049, %v1014
        %v1056 = vsel %vm1052, %v1050, %v1015
        %1061 = vrot.lane.b32.xlu0 %v1053, 126
        %v1062 = vpop.permute.xlu0 %1061
        %1063 = vrot.lane.b32.xlu0 %v1054, 126
        %v1064 = vpop.permute.xlu0 %1063
        %1065 = vrot.lane.b32.xlu0 %v1055, 126
        %v1066 = vpop.permute.xlu0 %1065
        %1067 = vrot.lane.b32.xlu0 %v1056, 126
        %v1068 = vpop.permute.xlu0 %1067
        %1073 = vrot.lane.b32.xlu0 %v1053, 31
        %v1074 = vpop.permute.xlu0 %1073
        %1075 = vrot.lane.b32.xlu0 %v1054, 31
        %v1076 = vpop.permute.xlu0 %1075
        %1077 = vrot.lane.b32.xlu0 %v1055, 31
        %v1078 = vpop.permute.xlu0 %1077
        %1079 = vrot.lane.b32.xlu0 %v1056, 31
        %v1080 = vpop.permute.xlu0 %1079
        %vm1085 = vcmask 252928
        %v1086 = vsel %vm1085, %v1062, %v1074
        %v1087 = vsel %vm1085, %v1064, %v1076
        %v1088 = vsel %vm1085, %v1066, %v1078
        %v1089 = vsel %vm1085, %v1068, %v1080
        %v1090 = vand.u32 %v1018, 2
        %vm1091 = vcmp.ne.s32.totalorder %v1090, 0
        %v1092 = vsel %vm1091, %v1086, %v1053
        %v1093 = vsel %vm1091, %v1087, %v1054
        %v1094 = vsel %vm1091, %v1088, %v1055
        %v1095 = vsel %vm1091, %v1089, %v1056
        %1100 = vrot.lane.b32.xlu0 %v1092, 124
        %v1101 = vpop.permute.xlu0 %1100
        %1102 = vrot.lane.b32.xlu0 %v1093, 124
        %v1103 = vpop.permute.xlu0 %1102
        %1104 = vrot.lane.b32.xlu0 %v1094, 124
        %v1105 = vpop.permute.xlu0 %1104
        %1106 = vrot.lane.b32.xlu0 %v1095, 124
        %v1107 = vpop.permute.xlu0 %1106
        %1112 = vrot.lane.b32.xlu0 %v1092, 29
        %v1113 = vpop.permute.xlu0 %1112
        %1114 = vrot.lane.b32.xlu0 %v1093, 29
        %v1115 = vpop.permute.xlu0 %1114
        %1116 = vrot.lane.b32.xlu0 %v1094, 29
        %v1117 = vpop.permute.xlu0 %1116
        %1118 = vrot.lane.b32.xlu0 %v1095, 29
        %v1119 = vpop.permute.xlu0 %1118
        %vm1124 = vcmask 236544
        %v1125 = vsel %vm1124, %v1101, %v1113
        %v1126 = vsel %vm1124, %v1103, %v1115
        %v1127 = vsel %vm1124, %v1105, %v1117
        %v1128 = vsel %vm1124, %v1107, %v1119
        %v1129 = vand.u32 %v1018, 4
        %vm1130 = vcmp.ne.s32.totalorder %v1129, 0
        %v1131 = vsel %vm1130, %v1125, %v1092
        %v1132 = vsel %vm1130, %v1126, %v1093
        %v1133 = vsel %vm1130, %v1127, %v1094
        %v1134 = vsel %vm1130, %v1128, %v1095
        %v1136 = vsel %vm856, %v832, 0
        %v1139 = vsel %vm856, %v520, 0
        %v1142 = vsel %vm856, %v523, 0
        %1144 = vmatpush.xpose.msra.mxu0 0.0
        %1145 = vmatpush.xpose.msra.mxu0 0.0
        %1146 = vmatpush.xpose.msra.mxu0 0.0
        %1147 = vmatpush.xpose.msra.mxu0 0.0
        %1148 = vmatpush.xpose.msra.mxu0 0.0
        %1149 = vmatpush.xpose.msra.mxu0 0.0
        %1150 = vmatpush.xpose.msra.mxu0 0.0
        %1151 = vmatpush.xpose.msra.mxu0 0.0
        %1152 = vmatpush.xpose.msra.mxu0 0.0
        %1153 = vmatpush.xpose.msra.mxu0 0.0
        %1154 = vmatpush.xpose.msra.mxu0 0.0
        %1155 = vmatpush.xpose.msra.mxu0 0.0
        %1156 = vmatpush.xpose.msra.mxu0 0.0
        %1157 = vmatpush.xpose.msra.mxu0 0.0
        %1158 = vmatpush.xpose.msra.mxu0 %v1142
        %1159 = vmatpush.xpose.msra.mxu0 %v1139
        %1160 = vmatmul.f32.gmra.mxu0 %v1136
        %v1161 = vpop.f32.mrf.mxu0
        %v1162 = vadd.f32 %v1131, %v1161
        %1163 = vdwg.mxu0
        %v1165 = vsel %vm856, %v833, 0
        %v1168 = vsel %vm856, %v543, 0
        %v1171 = vsel %vm856, %v546, 0
        %1173 = vmatpush.xpose.msra.mxu0 0.0
        %1174 = vmatpush.xpose.msra.mxu0 0.0
        %1175 = vmatpush.xpose.msra.mxu0 0.0
        %1176 = vmatpush.xpose.msra.mxu0 0.0
        %1177 = vmatpush.xpose.msra.mxu0 0.0
        %1178 = vmatpush.xpose.msra.mxu0 0.0
        %1179 = vmatpush.xpose.msra.mxu0 0.0
        %1180 = vmatpush.xpose.msra.mxu0 0.0
        %1181 = vmatpush.xpose.msra.mxu0 0.0
        %1182 = vmatpush.xpose.msra.mxu0 0.0
        %1183 = vmatpush.xpose.msra.mxu0 0.0
        %1184 = vmatpush.xpose.msra.mxu0 0.0
        %1185 = vmatpush.xpose.msra.mxu0 0.0
        %1186 = vmatpush.xpose.msra.mxu0 0.0
        %1187 = vmatpush.xpose.msra.mxu0 %v1171
        %1188 = vmatpush.xpose.msra.mxu0 %v1168
        %1189 = vmatmul.f32.gmra.mxu0 %v1165
        %v1190 = vpop.f32.mrf.mxu0
        %v1191 = vadd.f32 %v1132, %v1190
        %1192 = vdwg.mxu0
        %v1194 = vsel %vm856, %v834, 0
        %v1197 = vsel %vm856, %v566, 0
        %v1200 = vsel %vm856, %v569, 0
        %1202 = vmatpush.xpose.msra.mxu0 0.0
        %1203 = vmatpush.xpose.msra.mxu0 0.0
        %1204 = vmatpush.xpose.msra.mxu0 0.0
        %1205 = vmatpush.xpose.msra.mxu0 0.0
        %1206 = vmatpush.xpose.msra.mxu0 0.0
        %1207 = vmatpush.xpose.msra.mxu0 0.0
        %1208 = vmatpush.xpose.msra.mxu0 0.0
        %1209 = vmatpush.xpose.msra.mxu0 0.0
        %1210 = vmatpush.xpose.msra.mxu0 0.0
        %1211 = vmatpush.xpose.msra.mxu0 0.0
        %1212 = vmatpush.xpose.msra.mxu0 0.0
        %1213 = vmatpush.xpose.msra.mxu0 0.0
        %1214 = vmatpush.xpose.msra.mxu0 0.0
        %1215 = vmatpush.xpose.msra.mxu0 0.0
        %1216 = vmatpush.xpose.msra.mxu0 %v1200
        %1217 = vmatpush.xpose.msra.mxu0 %v1197
        %1218 = vmatmul.f32.gmra.mxu0 %v1194
        %v1219 = vpop.f32.mrf.mxu0
        %v1220 = vadd.f32 %v1133, %v1219
        %1221 = vdwg.mxu0
        %v1223 = vsel %vm856, %v835, 0
        %v1226 = vsel %vm856, %v589, 0
        %v1229 = vsel %vm856, %v592, 0
        %1231 = vmatpush.xpose.msra.mxu0 0.0
        %1232 = vmatpush.xpose.msra.mxu0 0.0
        %1233 = vmatpush.xpose.msra.mxu0 0.0
        %1234 = vmatpush.xpose.msra.mxu0 0.0
        %1235 = vmatpush.xpose.msra.mxu0 0.0
        %1236 = vmatpush.xpose.msra.mxu0 0.0
        %1237 = vmatpush.xpose.msra.mxu0 0.0
        %1238 = vmatpush.xpose.msra.mxu0 0.0
        %1239 = vmatpush.xpose.msra.mxu0 0.0
        %1240 = vmatpush.xpose.msra.mxu0 0.0
        %1241 = vmatpush.xpose.msra.mxu0 0.0
        %1242 = vmatpush.xpose.msra.mxu0 0.0
        %1243 = vmatpush.xpose.msra.mxu0 0.0
        %1244 = vmatpush.xpose.msra.mxu0 0.0
        %1245 = vmatpush.xpose.msra.mxu0 %v1229
        %1246 = vmatpush.xpose.msra.mxu0 %v1226
        %1247 = vmatmul.f32.gmra.mxu0 %v1223
        %v1248 = vpop.f32.mrf.mxu0
        %v1249 = vadd.f32 %v1134, %v1248
        %1250 = vdwg.mxu0
        %v1251 = vmul.f32 %v1162, 0.35355338
        %v1252 = vmul.f32 %v1191, 0.35355338
        %v1253 = vmul.f32 %v1220, 0.35355338
        %v1254 = vmul.f32 %v1249, 0.35355338
        %v1255 = vsel %vm1006, %v1251, -inf
        %1256 = vmax.xlane.f32.xlu0 %v1255
        %v1257 = vpop.xlane.xlu0 %1256
        %v1258 = vsel %vm1006, %v1252, -inf
        %1259 = vmax.xlane.f32.xlu0 %v1258
        %v1260 = vpop.xlane.xlu0 %1259
        %v1261 = vsel %vm1006, %v1253, -inf
        %1262 = vmax.xlane.f32.xlu0 %v1261
        %v1263 = vpop.xlane.xlu0 %1262
        %v1264 = vsel %vm1006, %v1254, -inf
        %1265 = vmax.xlane.f32.xlu0 %v1264
        %v1266 = vpop.xlane.xlu0 %1265
        %v1267 = vsub.f32 %v1251, %v1257
        %v1268 = vsub.f32 %v1252, %v1260
        %v1269 = vsub.f32 %v1253, %v1263
        %v1270 = vsub.f32 %v1254, %v1266
        %v1271 = vmul.f32 %v1267, 1.442695
        %v1272 = vpow.pop %v1271
        %v1273 = vmul.f32 %v1268, 1.442695
        %v1274 = vpow.pop %v1273
        %v1275 = vmul.f32 %v1269, 1.442695
        %v1276 = vpow.pop %v1275
        %v1277 = vmul.f32 %v1270, 1.442695
        %v1278 = vpow.pop %v1277
        %v1279 = vsel %vm1006, %v1272, 0.0
        %1280 = vadd.xlane.f32.xlu0 %v1279
        %v1281 = vpop.xlane.xlu0 %1280
        %v1282 = vsel %vm1006, %v1274, 0.0
        %1283 = vadd.xlane.f32.xlu0 %v1282
        %v1284 = vpop.xlane.xlu0 %1283
        %v1285 = vsel %vm1006, %v1276, 0.0
        %1286 = vadd.xlane.f32.xlu0 %v1285
        %v1287 = vpop.xlane.xlu0 %1286
        %v1288 = vsel %vm1006, %v1278, 0.0
        %1289 = vadd.xlane.f32.xlu0 %v1288
        %v1290 = vpop.xlane.xlu0 %1289
        %v1291 = vrcp.pop %v1281
        %v1292 = vmul.f32 %v1281, %v1291
        %v1293 = vsub.f32 1.0, %v1292
        %v1294 = vmul.f32 %v1291, %v1293
        %v1295 = vadd.f32 %v1291, %v1294
        %vm1296 = vweird.f32 %v1281
        %vm1297 = vweird.f32 %v1291
        %vm1298 = vmor %vm1296, %vm1297
        %v1299 = vsel %vm1298, %v1291, %v1295
        %v1300 = vand.u32 2147483647, %v1281
        %vm1301 = vcmp.eq.f32.partialorder %v1300, 8.507059e+37
        %v1302 = vand.u32 %v1281, 2147483648
        %v1303 = vor.u32 1.1754944e-38, %v1302
        %v1304 = vsel %vm1301, %v1303, %v1299
        %v1305 = vrcp.pop %v1284
        %v1306 = vmul.f32 %v1284, %v1305
        %v1307 = vsub.f32 1.0, %v1306
        %v1308 = vmul.f32 %v1305, %v1307
        %v1309 = vadd.f32 %v1305, %v1308
        %vm1310 = vweird.f32 %v1284
        %vm1311 = vweird.f32 %v1305
        %vm1312 = vmor %vm1310, %vm1311
        %v1313 = vsel %vm1312, %v1305, %v1309
        %v1314 = vand.u32 2147483647, %v1284
        %vm1315 = vcmp.eq.f32.partialorder %v1314, 8.507059e+37
        %v1316 = vand.u32 %v1284, 2147483648
        %v1317 = vor.u32 1.1754944e-38, %v1316
        %v1318 = vsel %vm1315, %v1317, %v1313
        %v1319 = vrcp.pop %v1287
        %v1320 = vmul.f32 %v1287, %v1319
        %v1321 = vsub.f32 1.0, %v1320
        %v1322 = vmul.f32 %v1319, %v1321
        %v1323 = vadd.f32 %v1319, %v1322
        %vm1324 = vweird.f32 %v1287
        %vm1325 = vweird.f32 %v1319
        %vm1326 = vmor %vm1324, %vm1325
        %v1327 = vsel %vm1326, %v1319, %v1323
        %v1328 = vand.u32 2147483647, %v1287
        %vm1329 = vcmp.eq.f32.partialorder %v1328, 8.507059e+37
        %v1330 = vand.u32 %v1287, 2147483648
        %v1331 = vor.u32 1.1754944e-38, %v1330
        %v1332 = vsel %vm1329, %v1331, %v1327
        %v1333 = vrcp.pop %v1290
        %v1334 = vmul.f32 %v1290, %v1333
        %v1335 = vsub.f32 1.0, %v1334
        %v1336 = vmul.f32 %v1333, %v1335
        %v1337 = vadd.f32 %v1333, %v1336
        %vm1338 = vweird.f32 %v1290
        %vm1339 = vweird.f32 %v1333
        %vm1340 = vmor %vm1338, %vm1339
        %v1341 = vsel %vm1340, %v1333, %v1337
        %v1342 = vand.u32 2147483647, %v1290
        %vm1343 = vcmp.eq.f32.partialorder %v1342, 8.507059e+37
        %v1344 = vand.u32 %v1290, 2147483648
        %v1345 = vor.u32 1.1754944e-38, %v1344
        %v1346 = vsel %vm1343, %v1345, %v1341
        %v1347 = vmul.f32 %v1272, %v1304
        %v1348 = vmul.f32 %v1274, %v1318
        %v1349 = vmul.f32 %v1276, %v1332
        %v1350 = vmul.f32 %v1278, %v1346
        %v1352 = vsel %vm1006, %v1347, 0
        %1354 = vmatpush.msra.mxu0 0.0
        %1355 = vmatpush.msra.mxu0 0.0
        %1356 = vmatpush.msra.mxu0 0.0
        %1357 = vmatpush.msra.mxu0 0.0
        %1358 = vmatpush.msra.mxu0 0.0
        %1359 = vmatpush.msra.mxu0 0.0
        %1360 = vmatpush.msra.mxu0 0.0
        %1361 = vmatpush.msra.mxu0 0.0
        %1362 = vmatpush.msra.mxu0 0.0
        %1363 = vmatpush.msra.mxu0 0.0
        %1364 = vmatpush.msra.mxu0 0.0
        %1365 = vmatpush.msra.mxu0 0.0
        %1366 = vmatpush.msra.mxu0 0.0
        %1367 = vmatpush.msra.mxu0 0.0
        %1368 = vmatpush.msra.mxu0 %v631
        %1369 = vmatpush.msra.mxu0 %v628
        %1370 = vmatmul.f32.gmra.mxu0 %v1352
        %v1371 = vpop.f32.mrf.mxu0
        %v1372 = vadd.f32 0.0, %v1371
        %1373 = vdwg.mxu0
        %v1375 = vsel %vm1006, %v1348, 0
        %1377 = vmatpush.msra.mxu0 0.0
        %1378 = vmatpush.msra.mxu0 0.0
        %1379 = vmatpush.msra.mxu0 0.0
        %1380 = vmatpush.msra.mxu0 0.0
        %1381 = vmatpush.msra.mxu0 0.0
        %1382 = vmatpush.msra.mxu0 0.0
        %1383 = vmatpush.msra.mxu0 0.0
        %1384 = vmatpush.msra.mxu0 0.0
        %1385 = vmatpush.msra.mxu0 0.0
        %1386 = vmatpush.msra.mxu0 0.0
        %1387 = vmatpush.msra.mxu0 0.0
        %1388 = vmatpush.msra.mxu0 0.0
        %1389 = vmatpush.msra.mxu0 0.0
        %1390 = vmatpush.msra.mxu0 0.0
        %1391 = vmatpush.msra.mxu0 %v654
        %1392 = vmatpush.msra.mxu0 %v651
        %1393 = vmatmul.f32.gmra.mxu0 %v1375
        %v1394 = vpop.f32.mrf.mxu0
        %v1395 = vadd.f32 0.0, %v1394
        %1396 = vdwg.mxu0
        %v1398 = vsel %vm1006, %v1349, 0
        %1400 = vmatpush.msra.mxu0 0.0
        %1401 = vmatpush.msra.mxu0 0.0
        %1402 = vmatpush.msra.mxu0 0.0
        %1403 = vmatpush.msra.mxu0 0.0
        %1404 = vmatpush.msra.mxu0 0.0
        %1405 = vmatpush.msra.mxu0 0.0
        %1406 = vmatpush.msra.mxu0 0.0
        %1407 = vmatpush.msra.mxu0 0.0
        %1408 = vmatpush.msra.mxu0 0.0
        %1409 = vmatpush.msra.mxu0 0.0
        %1410 = vmatpush.msra.mxu0 0.0
        %1411 = vmatpush.msra.mxu0 0.0
        %1412 = vmatpush.msra.mxu0 0.0
        %1413 = vmatpush.msra.mxu0 0.0
        %1414 = vmatpush.msra.mxu0 %v677
        %1415 = vmatpush.msra.mxu0 %v674
        %1416 = vmatmul.f32.gmra.mxu0 %v1398
        %v1417 = vpop.f32.mrf.mxu0
        %v1418 = vadd.f32 0.0, %v1417
        %1419 = vdwg.mxu0
        %v1421 = vsel %vm1006, %v1350, 0
        %1423 = vmatpush.msra.mxu0 0.0
        %1424 = vmatpush.msra.mxu0 0.0
        %1425 = vmatpush.msra.mxu0 0.0
        %1426 = vmatpush.msra.mxu0 0.0
        %1427 = vmatpush.msra.mxu0 0.0
        %1428 = vmatpush.msra.mxu0 0.0
        %1429 = vmatpush.msra.mxu0 0.0
        %1430 = vmatpush.msra.mxu0 0.0
        %1431 = vmatpush.msra.mxu0 0.0
        %1432 = vmatpush.msra.mxu0 0.0
        %1433 = vmatpush.msra.mxu0 0.0
        %1434 = vmatpush.msra.mxu0 0.0
        %1435 = vmatpush.msra.mxu0 0.0
        %1436 = vmatpush.msra.mxu0 0.0
        %1437 = vmatpush.msra.mxu0 %v700
        %1438 = vmatpush.msra.mxu0 %v697
        %1439 = vmatmul.f32.gmra.mxu0 %v1421
        %v1440 = vpop.f32.mrf.mxu0
        %v1441 = vadd.f32 0.0, %v1440
        %1442 = vdwg.mxu0
        %v1443 = vld [vmem:[%s7] sm:$0xff]
        %v1444 = vld [vmem:[%s7 + $0x8] sm:$0xff]
        %v1445 = vld [vmem:[%s7 + $0x10] sm:$0xff]
        %v1446 = vld [vmem:[%s7 + $0x18] sm:$0xff]
        %v1448 = vsel %vm856, %v1372, 0
        %1450 = vmatpush.msra.mxu0 0.0
        %1451 = vmatpush.msra.mxu0 0.0
        %1452 = vmatpush.msra.mxu0 0.0
        %1453 = vmatpush.msra.mxu0 0.0
        %1454 = vmatpush.msra.mxu0 0.0
        %1455 = vmatpush.msra.mxu0 0.0
        %1456 = vmatpush.msra.mxu0 0.0
        %1457 = vmatpush.msra.mxu0 0.0
        %1458 = vmatpush.msra.mxu0 0.0
        %1459 = vmatpush.msra.mxu0 0.0
        %1460 = vmatpush.msra.mxu0 0.0
        %1461 = vmatpush.msra.mxu0 0.0
        %1462 = vmatpush.msra.mxu0 0.0
        %1463 = vmatpush.msra.mxu0 0.0
        %1464 = vmatpush.msra.mxu0 0.0
        %1465 = vmatpush.msra.mxu0 %v1443
        %1466 = vmatmul.f32.gmra.mxu0 %v1448
        %v1467 = vpop.f32.mrf.mxu0
        %v1468 = vadd.f32 0.0, %v1467
        %1469 = vdwg.mxu0
        %v1471 = vsel %vm856, %v1395, 0
        %1473 = vmatpush.msra.mxu0 0.0
        %1474 = vmatpush.msra.mxu0 0.0
        %1475 = vmatpush.msra.mxu0 0.0
        %1476 = vmatpush.msra.mxu0 0.0
        %1477 = vmatpush.msra.mxu0 0.0
        %1478 = vmatpush.msra.mxu0 0.0
        %1479 = vmatpush.msra.mxu0 0.0
        %1480 = vmatpush.msra.mxu0 0.0
        %1481 = vmatpush.msra.mxu0 0.0
        %1482 = vmatpush.msra.mxu0 0.0
        %1483 = vmatpush.msra.mxu0 0.0
        %1484 = vmatpush.msra.mxu0 0.0
        %1485 = vmatpush.msra.mxu0 0.0
        %1486 = vmatpush.msra.mxu0 0.0
        %1487 = vmatpush.msra.mxu0 0.0
        %1488 = vmatpush.msra.mxu0 %v1444
        %1489 = vmatmul.f32.gmra.mxu0 %v1471
        %v1490 = vpop.f32.mrf.mxu0
        %v1491 = vadd.f32 0.0, %v1490
        %1492 = vdwg.mxu0
        %v1494 = vsel %vm856, %v1418, 0
        %1496 = vmatpush.msra.mxu0 0.0
        %1497 = vmatpush.msra.mxu0 0.0
        %1498 = vmatpush.msra.mxu0 0.0
        %1499 = vmatpush.msra.mxu0 0.0
        %1500 = vmatpush.msra.mxu0 0.0
        %1501 = vmatpush.msra.mxu0 0.0
        %1502 = vmatpush.msra.mxu0 0.0
        %1503 = vmatpush.msra.mxu0 0.0
        %1504 = vmatpush.msra.mxu0 0.0
        %1505 = vmatpush.msra.mxu0 0.0
        %1506 = vmatpush.msra.mxu0 0.0
        %1507 = vmatpush.msra.mxu0 0.0
        %1508 = vmatpush.msra.mxu0 0.0
        %1509 = vmatpush.msra.mxu0 0.0
        %1510 = vmatpush.msra.mxu0 0.0
        %1511 = vmatpush.msra.mxu0 %v1445
        %1512 = vmatmul.f32.gmra.mxu0 %v1494
        %v1513 = vpop.f32.mrf.mxu0
        %v1514 = vadd.f32 0.0, %v1513
        %1515 = vdwg.mxu0
        %v1517 = vsel %vm856, %v1441, 0
        %1519 = vmatpush.msra.mxu0 0.0
        %1520 = vmatpush.msra.mxu0 0.0
        %1521 = vmatpush.msra.mxu0 0.0
        %1522 = vmatpush.msra.mxu0 0.0
        %1523 = vmatpush.msra.mxu0 0.0
        %1524 = vmatpush.msra.mxu0 0.0
        %1525 = vmatpush.msra.mxu0 0.0
        %1526 = vmatpush.msra.mxu0 0.0
        %1527 = vmatpush.msra.mxu0 0.0
        %1528 = vmatpush.msra.mxu0 0.0
        %1529 = vmatpush.msra.mxu0 0.0
        %1530 = vmatpush.msra.mxu0 0.0
        %1531 = vmatpush.msra.mxu0 0.0
        %1532 = vmatpush.msra.mxu0 0.0
        %1533 = vmatpush.msra.mxu0 0.0
        %1534 = vmatpush.msra.mxu0 %v1446
        %1535 = vmatmul.f32.gmra.mxu0 %v1517
        %v1536 = vpop.f32.mrf.mxu0
        %v1537 = vadd.f32 0.0, %v1536
        %1538 = vdwg.mxu0
        %v1539 = vsel %vm396, %v1468, 0.0
        %v1540 = vsel %vm396, %v1491, 0.0
        %v1541 = vadd.f32 %v1539, %v1540
        %v1542 = vsel %vm396, %v1514, 0.0
        %v1543 = vadd.f32 %v1541, %v1542
        %v1544 = vsel %vm396, %v1537, 0.0
        %v1545 = vadd.f32 %v1543, %v1544
        %1546 = vst.msk [vmem:[%s365] sm:$0xff] %vm396, %v1545
        %s1547 = sand.u32 %s252, 1
        %s1548 = scalar_lea.sflag [#allocation3], %s1547
        %s1549 = sand.u32 %s252, 1
        %s1550 = smul.addr %s1549, 8
        %s1551 = scalar_lea.vmem [#allocation2], %s1550
        // Predicated region
        $region61: #{tpu_custom_call.1} parent=59 // pred_check
          %p1552 = pneg %p262
        $region62: #{tpu_custom_call.1} parent=59 // pred_check_branch
          %1554 = sbr.rel (%p1552) target = $region64
        $region63: #{tpu_custom_call.1} parent=59 // pred_region
          %1556 = vsyncadd %s1548, 0
          %s1557 = smul.addr %s24, 8
          %s1558 = scalar_lea.hbm %s10, %s1557
          %s1560 = sshll.u32 %s1551, 4
          %s1561 = int_to_ptr.vmem [resolvable:$true] %s1560
          %s1562 = sshll.u32 %s1558, 4
          %s1563 = int_to_ptr.hbm [resolvable:$true] %s1562
          %1565 = dma.vmem_to_hbm [thread:$0]  %s1561, 128, %s1563, %s1548
        $region64: #{tpu_custom_call.1} parent=59 // pred_fallthru
          _
      $region60: #{tpu_custom_call.1} parent=5 // pred_fallthru
        _
      %p1566 = scmp.le.s32.totalorder 2, %s19
      // Predicated region
      $region65: #{tpu_custom_call.1} parent=5 // pred_check
        %p1567 = pneg %p1566
      $region66: #{tpu_custom_call.1} parent=5 // pred_check_branch
        %1569 = sbr.rel (%p1567) target = $region68
      $region67: #{tpu_custom_call.1} parent=5 // pred_region
        %s1570 = ssub.s32 %s19, 2
        // Predicated region
        $region69: #{tpu_custom_call.1} parent=67 // pred_check
          %p1571 = pneg %p268
        $region70: #{tpu_custom_call.1} parent=67 // pred_check_branch
          %1573 = sbr.rel (%p1571) target = $region72
        $region71: #{tpu_custom_call.1} parent=67 // pred_region
          %s1574 = sand.u32 %s253, 1
          %s1575 = scalar_lea.sflag [#allocation3], %s1574
          %s1576 = sand.u32 %s253, 1
          %s1577 = smul.addr %s1576, 8
          %s1578 = scalar_lea.vmem [#allocation2], %s1577
          %1580 = dma.done %s1575, 128
        $region72: #{tpu_custom_call.1} parent=67 // pred_fallthru
          _
      $region68: #{tpu_custom_call.1} parent=5 // pred_fallthru
        _
    $region6: #{tpu_custom_call.1} parent=1 // loop_footer
      %s23 = sadd.s32 1, %s19
    $region7: #{tpu_custom_call.1} parent=1 // loop_footer_branch
      %18 = sbr.rel target = $region3
    $region8: #{tpu_custom_call.1} parent=1 // loop_exit
      _
    %1581 = vsyncpa [#allocation3], 1
    %s1582 = scalar_lea.sflag [#allocation3], 1
    %1583 = vsyncpa %s1582, 1

</llo_original>
